<compile_context>
chip_gen: v6e
topology: v6e:2x2x1
jax: 0.10.0
libtpu: 0.0.40
codegen_flags: <defaults>
</compile_context>

<pallas_src>
import functools

import jax
import jax.numpy as jnp
from jax import lax
from jax.experimental import pallas as pl
from jax.experimental.pallas import tpu as pltpu

_NEG_BIG = -1e30  # finite "minus infinity" for padded vocab lanes


def _ngram_kernel(ids_ref,    # VMEM (TB, C)      int32 token ids
                  emb_ref,    # VMEM (Vpad, D)    f32 embedding table (row-padded)
                  w1_ref,     # VMEM (C*D, H)     f32
                  b1_ref,     # VMEM (1, H)       f32
                  w2_ref,     # VMEM (H, Vpad)    f32 (cols >= vocab are zero)
                  b2_ref,     # VMEM (1, Vpad)    f32 (lanes >= vocab are -1e30)
                  out_ref,    # VMEM (TB, Vpad)   f32 log-probs
                  acts_ref,   # VMEM scratch (TB, C*D) f32
                  *, context_size, emb_dim):
    tb = ids_ref.shape[0]
    vpad = emb_ref.shape[0]
    ids = ids_ref[...]                                            # (TB, C)

    # ---- embedding gather via one-hot matmuls into the activation scratch ----
    lane_iota = lax.broadcasted_iota(jnp.int32, (tb, vpad), 1)
    for c in range(context_size):                                 # tiny static loop
        sel = (ids[:, c:c + 1] == lane_iota).astype(jnp.float32)  # (TB, Vpad)
        rows = jnp.dot(sel, emb_ref[...],
                       preferred_element_type=jnp.float32)        # (TB, D)
        acts_ref[:, c * emb_dim:(c + 1) * emb_dim] = rows

    # ---- linear1 + ReLU : one (TB, C*D) @ (C*D, H) matmul ----
    h = jnp.dot(acts_ref[...], w1_ref[...],
                preferred_element_type=jnp.float32) + b1_ref[...]
    h = jnp.maximum(h, 0.0)

    # ---- linear2 (lane-dense padded vocab) ----
    logits = jnp.dot(h, w2_ref[...],
                     preferred_element_type=jnp.float32) + b2_ref[...]

    # ---- log_softmax over the vocab axis ----
    m = jnp.max(logits, axis=-1, keepdims=True)
    shifted = logits - m
    lse = jnp.log(jnp.sum(jnp.exp(shifted), axis=-1, keepdims=True))
    out_ref[...] = shifted - lse


def ngram_forward_batch(ids, emb_table, w1, b1, w2, b2, *, batch_tile=128):
    """ids: (B, context) int32.  Returns (B, vocab) f32 log-probs; each row is
    identical to the PyTorch single-sample forward applied to that n-gram."""
    vocab, emb_dim = emb_table.shape
    hidden, in_features = w1.shape
    batch, context = ids.shape
    assert in_features == context * emb_dim
    assert w2.shape == (vocab, hidden)
    assert b1.shape == (hidden,) and b2.shape == (vocab,)

    # Lane-dense padding of the vocab axis; sublane-dense batch tiling.
    vpad = max(128, pl.cdiv(vocab, 128) * 128)
    tb = min(batch_tile, max(8, pl.cdiv(batch, 8) * 8))
    n_tiles = pl.cdiv(batch, tb)
    bpad = n_tiles * tb

    # Parameter / input packing (pure layout glue, done once outside the kernel).
    emb_p = jnp.zeros((vpad, emb_dim), jnp.float32).at[:vocab].set(emb_table)
    w1r = jnp.transpose(w1)                                        # (C*D, H)
    b1r = b1.reshape(1, hidden)
    w2p = jnp.zeros((hidden, vpad), jnp.float32).at[:, :vocab].set(jnp.transpose(w2))
    b2p = jnp.full((1, vpad), _NEG_BIG, jnp.float32).at[0, :vocab].set(b2)
    ids_p = jnp.zeros((bpad, context), jnp.int32).at[:batch].set(ids.astype(jnp.int32))

    kernel = functools.partial(_ngram_kernel,
                               context_size=context, emb_dim=emb_dim)

    flops = 2 * bpad * (context * vpad * emb_dim       # one-hot gather matmuls
                        + context * emb_dim * hidden   # linear1
                        + hidden * vpad)               # linear2
    bytes_accessed = 4 * (ids_p.size + emb_p.size + w1r.size + b1r.size
                          + w2p.size + b2p.size + bpad * vpad)
    cost = pl.CostEstimate(flops=flops,
                           transcendentals=bpad * vpad,   # exp in log_softmax
                           bytes_accessed=bytes_accessed)

    grid_spec = pltpu.PrefetchScalarGridSpec(
        num_scalar_prefetch=0,
        grid=(n_tiles,),
        in_specs=[
            pl.BlockSpec((tb, context), lambda i: (i, 0)),               # ids
            pl.BlockSpec((vpad, emb_dim), lambda i: (0, 0)),             # embeddings
            pl.BlockSpec((context * emb_dim, hidden), lambda i: (0, 0)), # w1
            pl.BlockSpec((1, hidden), lambda i: (0, 0)),                 # b1
            pl.BlockSpec((hidden, vpad), lambda i: (0, 0)),              # w2
            pl.BlockSpec((1, vpad), lambda i: (0, 0)),                   # b2
        ],
        out_specs=pl.BlockSpec((tb, vpad), lambda i: (i, 0)),
        scratch_shapes=[pltpu.VMEM((tb, context * emb_dim), jnp.float32)],
    )

    out_padded = pl.pallas_call(
        kernel,
        out_shape=jax.ShapeDtypeStruct((bpad, vpad), jnp.float32),
        grid_spec=grid_spec,
        compiler_params=pltpu.CompilerParams(
            dimension_semantics=("parallel",)),
        cost_estimate=cost,
    )(ids_p, emb_p, w1r, b1r, w2p, b2p)

    return out_padded[:batch, :vocab]


def ngram_forward(inputs, emb_table, w1, b1, w2, b2):
    """PyTorch-equivalent single-sample forward: (context,) -> (1, vocab)."""
    return ngram_forward_batch(inputs[None, :], emb_table, w1, b1, w2, b2)


def ngram_reference_batch(ids, emb_table, w1, b1, w2, b2):
    """Pure-JAX reference mirroring the PyTorch forward, per batch row."""
    embeds = emb_table[ids].reshape(ids.shape[0], -1)
    out = jnp.maximum(embeds @ w1.T + b1, 0.0)
    out = out @ w2.T + b2
    return jax.nn.log_softmax(out, axis=-1)


if __name__ == "__main__":
    # Module hyper-parameters (consistent with the PyTorch __init__).
    VOCAB, EMB_DIM, CONTEXT, HIDDEN = 50, 16, 2, 128
    BATCH = 256                      # two batch tiles of 128 -> grid=(2,), parallel

    key = jax.random.PRNGKey(0)
    k_emb, k_w1, k_b1, k_w2, k_b2, k_idx = jax.random.split(key, 6)

    emb_table = jax.random.normal(k_emb, (VOCAB, EMB_DIM), jnp.float32) * 0.1
    w1 = jax.random.normal(k_w1, (HIDDEN, CONTEXT * EMB_DIM), jnp.float32) * 0.1
    b1 = jax.random.normal(k_b1, (HIDDEN,), jnp.float32) * 0.1
    w2 = jax.random.normal(k_w2, (VOCAB, HIDDEN), jnp.float32) * 0.1
    b2 = jax.random.normal(k_b2, (VOCAB,), jnp.float32) * 0.1

    ids = jax.random.randint(k_idx, (BATCH, CONTEXT), 0, VOCAB, jnp.int32)

    # Batched forward.
    log_probs = jax.block_until_ready(
        ngram_forward_batch(ids, emb_table, w1, b1, w2, b2))
    ref = ngram_reference_batch(ids, emb_table, w1, b1, w2, b2)
    assert log_probs.shape == (BATCH, VOCAB)
    assert jnp.allclose(log_probs, ref, atol=1e-4, rtol=1e-4), "batched mismatch"

    # Single-sample path (exact PyTorch forward signature: (context,) -> (1, vocab)).
    single = jax.block_until_ready(
        ngram_forward(ids[0], emb_table, w1, b1, w2, b2))
    assert single.shape == (1, VOCAB)
    assert jnp.allclose(single, ref[0:1], atol=1e-4, rtol=1e-4), "single mismatch"

    print("KERNEL_OK")
</pallas_src>

<mosaic_0001>
module attributes {stable_mosaic.version = 11 : i64} {
  func.func @_ngram_kernel(%arg0: i32, %arg1: memref<128x2xi32, #tpu.memory_space<vmem>>, %arg2: memref<128x16xf32, #tpu.memory_space<vmem>>, %arg3: memref<32x128xf32, #tpu.memory_space<vmem>>, %arg4: memref<1x128xf32, #tpu.memory_space<vmem>>, %arg5: memref<128x128xf32, #tpu.memory_space<vmem>>, %arg6: memref<1x128xf32, #tpu.memory_space<vmem>>, %arg7: memref<128x128xf32, #tpu.memory_space<vmem>>, %arg8: memref<128x32xf32, #tpu.memory_space<vmem>>) attributes {dimension_semantics = [#tpu.dimension_semantics<parallel>], iteration_bounds = array<i64: 2>, scalar_prefetch = 0 : i64, scratch_operands = 1 : i64, tpu.core_type = #tpu.core_type<tc>, window_params = [{transform_indices = @transform_0, window_bounds = array<i64: 128, 2>}, {pipeline_mode = #tpu.pipeline_mode<synchronous>, transform_indices = @transform_1, window_bounds = array<i64: 128, 16>}, {pipeline_mode = #tpu.pipeline_mode<synchronous>, transform_indices = @transform_2, window_bounds = array<i64: 32, 128>}, {pipeline_mode = #tpu.pipeline_mode<synchronous>, transform_indices = @transform_3, window_bounds = array<i64: 1, 128>}, {pipeline_mode = #tpu.pipeline_mode<synchronous>, transform_indices = @transform_4, window_bounds = array<i64: 128, 128>}, {pipeline_mode = #tpu.pipeline_mode<synchronous>, transform_indices = @transform_5, window_bounds = array<i64: 1, 128>}, {transform_indices = @transform_6, window_bounds = array<i64: 128, 128>}]} {
    %c0 = arith.constant 0 : index
    %c0_0 = arith.constant 0 : index
    %0 = vector.load %arg1[%c0, %c0_0] : memref<128x2xi32, #tpu.memory_space<vmem>>, vector<128x2xi32>
    %1 = tpu.iota {dimensions = array<i32: 1>} : vector<128x128xi32>
    %2 = vector.extract_strided_slice %0 {offsets = [0, 0], sizes = [128, 1], strides = [1, 1]} : vector<128x2xi32> to vector<128x1xi32>
    %3 = vector.broadcast %2 : vector<128x1xi32> to vector<128x128xi32>
    %4 = arith.cmpi eq, %3, %1 : vector<128x128xi32>
    %5 = arith.extui %4 : vector<128x128xi1> to vector<128x128xi32>
    %6 = arith.sitofp %5 : vector<128x128xi32> to vector<128x128xf32>
    %c0_1 = arith.constant 0 : index
    %c0_2 = arith.constant 0 : index
    %7 = vector.load %arg2[%c0_1, %c0_2] : memref<128x16xf32, #tpu.memory_space<vmem>>, vector<128x16xf32>
    %cst = arith.constant dense<0.000000e+00> : vector<128x16xf32>
    %8 = tpu.matmul %6, %7, %cst {dimension_numbers = #tpu.dot_dimension_numbers<[1], [0], [0], [1], [0, 0, 1, 1], [], []>} : vector<128x128xf32>, vector<128x16xf32>, vector<128x16xf32> -> vector<128x16xf32>
    %c0_3 = arith.constant 0 : index
    %c0_4 = arith.constant 0 : index
    %9 = vector.load %arg8[%c0_3, %c0_4] : memref<128x32xf32, #tpu.memory_space<vmem>>, vector<128x16xf32>
    tpu.vector_store %arg8[%c0_3, %c0_4], %8 {strides = array<i32>} : memref<128x32xf32, #tpu.memory_space<vmem>>, vector<128x16xf32>,
    %10 = vector.extract_strided_slice %0 {offsets = [0, 1], sizes = [128, 1], strides = [1, 1]} : vector<128x2xi32> to vector<128x1xi32>
    %11 = vector.broadcast %10 : vector<128x1xi32> to vector<128x128xi32>
    %12 = arith.cmpi eq, %11, %1 : vector<128x128xi32>
    %13 = arith.extui %12 : vector<128x128xi1> to vector<128x128xi32>
    %14 = arith.sitofp %13 : vector<128x128xi32> to vector<128x128xf32>
    %c0_5 = arith.constant 0 : index
    %c0_6 = arith.constant 0 : index
    %15 = vector.load %arg2[%c0_5, %c0_6] : memref<128x16xf32, #tpu.memory_space<vmem>>, vector<128x16xf32>
    %cst_7 = arith.constant dense<0.000000e+00> : vector<128x16xf32>
    %16 = tpu.matmul %14, %15, %cst_7 {dimension_numbers = #tpu.dot_dimension_numbers<[1], [0], [0], [1], [0, 0, 1, 1], [], []>} : vector<128x128xf32>, vector<128x16xf32>, vector<128x16xf32> -> vector<128x16xf32>
    %c0_8 = arith.constant 0 : index
    %c16 = arith.constant 16 : index
    %17 = vector.load %arg8[%c0_8, %c16] : memref<128x32xf32, #tpu.memory_space<vmem>>, vector<128x16xf32>
    tpu.vector_store %arg8[%c0_8, %c16], %16 {strides = array<i32>} : memref<128x32xf32, #tpu.memory_space<vmem>>, vector<128x16xf32>,
    %c0_9 = arith.constant 0 : index
    %c0_10 = arith.constant 0 : index
    %18 = vector.load %arg8[%c0_9, %c0_10] : memref<128x32xf32, #tpu.memory_space<vmem>>, vector<128x32xf32>
    %c0_11 = arith.constant 0 : index
    %c0_12 = arith.constant 0 : index
    %19 = vector.load %arg3[%c0_11, %c0_12] : memref<32x128xf32, #tpu.memory_space<vmem>>, vector<32x128xf32>
    %cst_13 = arith.constant dense<0.000000e+00> : vector<128x128xf32>
    %20 = tpu.matmul %18, %19, %cst_13 {dimension_numbers = #tpu.dot_dimension_numbers<[1], [0], [0], [1], [0, 0, 1, 1], [], []>} : vector<128x32xf32>, vector<32x128xf32>, vector<128x128xf32> -> vector<128x128xf32>
    %c0_14 = arith.constant 0 : index
    %c0_15 = arith.constant 0 : index
    %21 = vector.load %arg4[%c0_14, %c0_15] : memref<1x128xf32, #tpu.memory_space<vmem>>, vector<1x128xf32>
    %22 = vector.broadcast %21 : vector<1x128xf32> to vector<128x128xf32>
    %23 = arith.addf %20, %22 : vector<128x128xf32>
    %cst_16 = arith.constant 0.000000e+00 : f32
    %24 = vector.broadcast %cst_16 : f32 to vector<128x128xf32>
    %25 = arith.maximumf %23, %24 : vector<128x128xf32>
    %c0_17 = arith.constant 0 : index
    %c0_18 = arith.constant 0 : index
    %26 = vector.load %arg5[%c0_17, %c0_18] : memref<128x128xf32, #tpu.memory_space<vmem>>, vector<128x128xf32>
    %cst_19 = arith.constant dense<0.000000e+00> : vector<128x128xf32>
    %27 = tpu.matmul %25, %26, %cst_19 {dimension_numbers = #tpu.dot_dimension_numbers<[1], [0], [0], [1], [0, 0, 1, 1], [], []>} : vector<128x128xf32>, vector<128x128xf32>, vector<128x128xf32> -> vector<128x128xf32>
    %c0_20 = arith.constant 0 : index
    %c0_21 = arith.constant 0 : index
    %28 = vector.load %arg6[%c0_20, %c0_21] : memref<1x128xf32, #tpu.memory_space<vmem>>, vector<1x128xf32>
    %29 = vector.broadcast %28 : vector<1x128xf32> to vector<128x128xf32>
    %30 = arith.addf %27, %29 : vector<128x128xf32>
    %cst_22 = arith.constant dense<0xFF800000> : vector<128xf32>
    %31 = vector.multi_reduction <maximumf>, %30, %cst_22 [1] : vector<128x128xf32> to vector<128xf32>
    %32 = vector.shape_cast %31 : vector<128xf32> to vector<128x1xf32>
    %33 = vector.broadcast %32 : vector<128x1xf32> to vector<128x128xf32>
    %34 = arith.subf %30, %33 : vector<128x128xf32>
    %35 = math.exp %34 : vector<128x128xf32>
    %cst_23 = arith.constant dense<0.000000e+00> : vector<128xf32>
    %36 = vector.multi_reduction <add>, %35, %cst_23 [1] : vector<128x128xf32> to vector<128xf32>
    %37 = vector.shape_cast %36 : vector<128xf32> to vector<128x1xf32>
    %38 = math.log %37 : vector<128x1xf32>
    %39 = vector.broadcast %38 : vector<128x1xf32> to vector<128x128xf32>
    %40 = arith.subf %34, %39 : vector<128x128xf32>
    %c0_24 = arith.constant 0 : index
    %c0_25 = arith.constant 0 : index
    %41 = vector.load %arg7[%c0_24, %c0_25] : memref<128x128xf32, #tpu.memory_space<vmem>>, vector<128x128xf32>
    tpu.vector_store %arg7[%c0_24, %c0_25], %40 {strides = array<i32>} : memref<128x128xf32, #tpu.memory_space<vmem>>, vector<128x128xf32>,
    return
  }
  func.func @transform_0(%arg0: i32) -> (i32, i32) {
    %c0_i32 = arith.constant 0 : i32
    %c0_i32_0 = arith.constant 0 : i32
    return %arg0, %c0_i32 : i32, i32
  }
  func.func @transform_1(%arg0: i32) -> (i32, i32) {
    %c0_i32 = arith.constant 0 : i32
    %c0_i32_0 = arith.constant 0 : i32
    %c0_i32_1 = arith.constant 0 : i32
    return %c0_i32, %c0_i32_0 : i32, i32
  }
  func.func @transform_2(%arg0: i32) -> (i32, i32) {
    %c0_i32 = arith.constant 0 : i32
    %c0_i32_0 = arith.constant 0 : i32
    %c0_i32_1 = arith.constant 0 : i32
    return %c0_i32, %c0_i32_0 : i32, i32
  }
  func.func @transform_3(%arg0: i32) -> (i32, i32) {
    %c0_i32 = arith.constant 0 : i32
    %c0_i32_0 = arith.constant 0 : i32
    %c0_i32_1 = arith.constant 0 : i32
    return %c0_i32, %c0_i32_0 : i32, i32
  }
  func.func @transform_4(%arg0: i32) -> (i32, i32) {
    %c0_i32 = arith.constant 0 : i32
    %c0_i32_0 = arith.constant 0 : i32
    %c0_i32_1 = arith.constant 0 : i32
    return %c0_i32, %c0_i32_0 : i32, i32
  }
  func.func @transform_5(%arg0: i32) -> (i32, i32) {
    %c0_i32 = arith.constant 0 : i32
    %c0_i32_0 = arith.constant 0 : i32
    %c0_i32_1 = arith.constant 0 : i32
    return %c0_i32, %c0_i32_0 : i32, i32
  }
  func.func @transform_6(%arg0: i32) -> (i32, i32) {
    %c0_i32 = arith.constant 0 : i32
    %c0_i32_0 = arith.constant 0 : i32
    return %arg0, %c0_i32 : i32, i32
  }
}

</mosaic_0001>

<llo_original>
// kernel: tpu_custom_call.1
$region0: #{tpu_custom_call.1}
  #allocation0 [shape = 'u32[]', space=smem, size = 0x4, offset = 0x4, fixed_abs, tag = 'smem constant byte address 0x4 - core index']
  #allocation1 [shape = 'u32[144,128]{1,0:T(1,128)}', space=vmem, size = 0x12000, scoped, tag = 'internal scratch']
  #allocation2 [shape = 'f32[128,32]{1,0:T(8,128)}', space=vmem, size = 0x10000, scoped, tag = 'scratch operand']
  %s0 = inlined_call_operand.vmem [shape: s32[256,2], index: 0, kind: input, shape index: {}]
  %s1 = inlined_call_operand.vmem [shape: f32[128,16], index: 1, kind: input, shape index: {}]
  %s2 = inlined_call_operand.vmem [shape: f32[32,128], index: 2, kind: input, shape index: {}]
  %s3 = inlined_call_operand.vmem [shape: f32[1,128], index: 3, kind: input, shape index: {}]
  %s4 = inlined_call_operand.vmem [shape: f32[128,128], index: 4, kind: input, shape index: {}]
  %s5 = inlined_call_operand.vmem [shape: f32[1,128], index: 5, kind: input, shape index: {}]
  %s6 = inlined_call_operand.hbm [shape: f32[256,128], index: 6, kind: output, shape index: {}]
  %s7 = sld [smem:[#allocation0]]
  $region57: #{tpu_custom_call.1} parent=0
    _
  %s9 = ssub.s32 1, %s7
  %s10 = scalar_select 0, %s9, %s7
  $region1: #{tpu_custom_call.1} parent=0
    #allocation3 [shape = 'u8[131072]{0}', space=vmem, size = 0x20000, scoped, tag = 'output window, operand 0']
    #allocation4 [shape = 's32[2]{0}', space=sflag, size = 0x8, scoped, tag = 'scoped memory for tpu_custom_call.1']
    %11 = vsyncpa [#allocation4], 0
    %s12 = scalar_lea.sflag [#allocation4], 1
    %13 = vsyncpa %s12, 0
    loop: start=0, step=1, limit=4
    $region2: #{tpu_custom_call.1} parent=1 // loop_pre_header
      _
    $region3: #{tpu_custom_call.1} parent=1 // loop_header
      %s15 = sphi 0, %s19
      %p16 = scmp.ge.s32.totalorder %s15, 4
      %s25 = sphi 0, %s27
      %s28 = sphi 0, %s25
      %s29 = sphi 0, %s28
      %s45 = sphi 0, %s29
      %s49 = sphi 0, %s49
      %s51 = sphi 0, %s49
      %s52 = sphi 0, %s51
      %s66 = sphi 0, %s52
      %s70 = sphi 0, %s70
      %s72 = sphi 0, %s70
      %s73 = sphi 0, %s72
      %s87 = sphi 0, %s73
      %s91 = sphi 0, %s91
      %s93 = sphi 0, %s91
      %s94 = sphi 0, %s93
      %s108 = sphi 0, %s94
      %s112 = sphi 0, %s112
      %s114 = sphi 0, %s112
      %s115 = sphi 0, %s114
      %s129 = sphi 0, %s115
      %s133 = sphi 0, %s133
      %s135 = sphi 0, %s133
      %s136 = sphi 0, %s135
      %s150 = sphi 0, %s136
      %s156 = sphi 0, %s158
      %s159 = sphi 0, %s156
      %s160 = sphi 0, %s159
      %s176 = sphi 0, %s160
    $region4: #{tpu_custom_call.1} parent=1 // loop_header_branch
      %18 = sbr.rel (%p16) target = $region8
    $region5: #{tpu_custom_call.1} parent=1 // loop_body
      %s20 = ssub.s32 %s15, 1
      %s21 = ssub.s32 %s15, 2
      %s22 = sadd.s32 %s15, 1
      %s23 = ssub.s32 %s15, %s22
      %p24 = scmp.eq.s32.totalorder %s23, 0
      %s26 = sadd.s32 %s25, 1
      %s27 = scalar_select %p24, %s25, %s26
      %p30 = pneg %p24
      %p31 = scmp.eq.s32.totalorder %s15, 1
      %p32 = por %p30, %p31
      %p33 = scmp.ne.s32.totalorder %s25, %s28
      %p34 = scmp.eq.s32.totalorder %s15, 0
      %p35 = por %p33, %p34
      %p36 = scmp.ne.s32.totalorder %s25, %s28
      %p37 = scmp.eq.s32.totalorder %s20, 1
      %p38 = por %p36, %p37
      %p39 = scmp.ne.s32.totalorder %s28, %s29
      %p40 = scmp.eq.s32.totalorder %s20, 0
      %p41 = por %p39, %p40
      %p42 = scmp.ne.s32.totalorder %s28, %s29
      %p43 = scmp.eq.s32.totalorder %s21, 1
      %p44 = por %p42, %p43
      %p46 = scmp.ne.s32.totalorder %s29, %s45
      %p47 = scmp.eq.s32.totalorder %s21, 0
      %p48 = por %p46, %p47
      %s50 = sadd.s32 %s49, 1
      %p53 = scmp.eq.s32.totalorder %s15, 1
      %p54 = scmp.ne.s32.totalorder %s49, %s51
      %p55 = scmp.eq.s32.totalorder %s15, 0
      %p56 = por %p54, %p55
      %p57 = scmp.ne.s32.totalorder %s49, %s51
      %p58 = scmp.eq.s32.totalorder %s20, 1
      %p59 = por %p57, %p58
      %p60 = scmp.ne.s32.totalorder %s51, %s52
      %p61 = scmp.eq.s32.totalorder %s20, 0
      %p62 = por %p60, %p61
      %p63 = scmp.ne.s32.totalorder %s51, %s52
      %p64 = scmp.eq.s32.totalorder %s21, 1
      %p65 = por %p63, %p64
      %p67 = scmp.ne.s32.totalorder %s52, %s66
      %p68 = scmp.eq.s32.totalorder %s21, 0
      %p69 = por %p67, %p68
      %s71 = sadd.s32 %s70, 1
      %p74 = scmp.eq.s32.totalorder %s15, 1
      %p75 = scmp.ne.s32.totalorder %s70, %s72
      %p76 = scmp.eq.s32.totalorder %s15, 0
      %p77 = por %p75, %p76
      %p78 = scmp.ne.s32.totalorder %s70, %s72
      %p79 = scmp.eq.s32.totalorder %s20, 1
      %p80 = por %p78, %p79
      %p81 = scmp.ne.s32.totalorder %s72, %s73
      %p82 = scmp.eq.s32.totalorder %s20, 0
      %p83 = por %p81, %p82
      %p84 = scmp.ne.s32.totalorder %s72, %s73
      %p85 = scmp.eq.s32.totalorder %s21, 1
      %p86 = por %p84, %p85
      %p88 = scmp.ne.s32.totalorder %s73, %s87
      %p89 = scmp.eq.s32.totalorder %s21, 0
      %p90 = por %p88, %p89
      %s92 = sadd.s32 %s91, 1
      %p95 = scmp.eq.s32.totalorder %s15, 1
      %p96 = scmp.ne.s32.totalorder %s91, %s93
      %p97 = scmp.eq.s32.totalorder %s15, 0
      %p98 = por %p96, %p97
      %p99 = scmp.ne.s32.totalorder %s91, %s93
      %p100 = scmp.eq.s32.totalorder %s20, 1
      %p101 = por %p99, %p100
      %p102 = scmp.ne.s32.totalorder %s93, %s94
      %p103 = scmp.eq.s32.totalorder %s20, 0
      %p104 = por %p102, %p103
      %p105 = scmp.ne.s32.totalorder %s93, %s94
      %p106 = scmp.eq.s32.totalorder %s21, 1
      %p107 = por %p105, %p106
      %p109 = scmp.ne.s32.totalorder %s94, %s108
      %p110 = scmp.eq.s32.totalorder %s21, 0
      %p111 = por %p109, %p110
      %s113 = sadd.s32 %s112, 1
      %p116 = scmp.eq.s32.totalorder %s15, 1
      %p117 = scmp.ne.s32.totalorder %s112, %s114
      %p118 = scmp.eq.s32.totalorder %s15, 0
      %p119 = por %p117, %p118
      %p120 = scmp.ne.s32.totalorder %s112, %s114
      %p121 = scmp.eq.s32.totalorder %s20, 1
      %p122 = por %p120, %p121
      %p123 = scmp.ne.s32.totalorder %s114, %s115
      %p124 = scmp.eq.s32.totalorder %s20, 0
      %p125 = por %p123, %p124
      %p126 = scmp.ne.s32.totalorder %s114, %s115
      %p127 = scmp.eq.s32.totalorder %s21, 1
      %p128 = por %p126, %p127
      %p130 = scmp.ne.s32.totalorder %s115, %s129
      %p131 = scmp.eq.s32.totalorder %s21, 0
      %p132 = por %p130, %p131
      %s134 = sadd.s32 %s133, 1
      %p137 = scmp.eq.s32.totalorder %s15, 1
      %p138 = scmp.ne.s32.totalorder %s133, %s135
      %p139 = scmp.eq.s32.totalorder %s15, 0
      %p140 = por %p138, %p139
      %p141 = scmp.ne.s32.totalorder %s133, %s135
      %p142 = scmp.eq.s32.totalorder %s20, 1
      %p143 = por %p141, %p142
      %p144 = scmp.ne.s32.totalorder %s135, %s136
      %p145 = scmp.eq.s32.totalorder %s20, 0
      %p146 = por %p144, %p145
      %p147 = scmp.ne.s32.totalorder %s135, %s136
      %p148 = scmp.eq.s32.totalorder %s21, 1
      %p149 = por %p147, %p148
      %p151 = scmp.ne.s32.totalorder %s136, %s150
      %p152 = scmp.eq.s32.totalorder %s21, 0
      %p153 = por %p151, %p152
      %s154 = ssub.s32 %s15, %s22
      %p155 = scmp.eq.s32.totalorder %s154, 0
      %s157 = sadd.s32 %s156, 1
      %s158 = scalar_select %p155, %s156, %s157
      %p161 = pneg %p155
      %p162 = scmp.eq.s32.totalorder %s15, 1
      %p163 = por %p161, %p162
      %p164 = scmp.ne.s32.totalorder %s156, %s159
      %p165 = scmp.eq.s32.totalorder %s15, 0
      %p166 = por %p164, %p165
      %p167 = scmp.ne.s32.totalorder %s156, %s159
      %p168 = scmp.eq.s32.totalorder %s20, 1
      %p169 = por %p167, %p168
      %p170 = scmp.ne.s32.totalorder %s159, %s160
      %p171 = scmp.eq.s32.totalorder %s20, 0
      %p172 = por %p170, %p171
      %p173 = scmp.ne.s32.totalorder %s159, %s160
      %p174 = scmp.eq.s32.totalorder %s21, 1
      %p175 = por %p173, %p174
      %p177 = scmp.ne.s32.totalorder %s160, %s176
      %p178 = scmp.eq.s32.totalorder %s21, 0
      %p179 = por %p177, %p178
      %p180 = scmp.le.s32.totalorder 1, %s15
      %p181 = scmp.lt.s32.totalorder %s15, 3
      %p182 = pnand %p180, %p181
      %p183 = pneg %p182
      // Predicated region
      $region9: #{tpu_custom_call.1} parent=5 // pred_check
        _
      $region10: #{tpu_custom_call.1} parent=5 // pred_check_branch
        %185 = sbr.rel (%p182) target = $region12
      $region11: #{tpu_custom_call.1} parent=5 // pred_region
        %s186 = ssub.s32 %s15, 1
        // Predicated region
        $region13: #{tpu_custom_call.1} parent=11 // pred_check
          %p187 = pneg %p62
        $region14: #{tpu_custom_call.1} parent=11 // pred_check_branch
          %189 = sbr.rel (%p187) target = $region16
        $region15: #{tpu_custom_call.1} parent=11 // pred_region
          _
        $region16: #{tpu_custom_call.1} parent=11 // pred_fallthru
          _
        // Predicated region
        $region17: #{tpu_custom_call.1} parent=11 // pred_check
          %p190 = pneg %p83
        $region18: #{tpu_custom_call.1} parent=11 // pred_check_branch
          %192 = sbr.rel (%p190) target = $region20
        $region19: #{tpu_custom_call.1} parent=11 // pred_region
          _
        $region20: #{tpu_custom_call.1} parent=11 // pred_fallthru
          _
        // Predicated region
        $region21: #{tpu_custom_call.1} parent=11 // pred_check
          %p193 = pneg %p104
        $region22: #{tpu_custom_call.1} parent=11 // pred_check_branch
          %195 = sbr.rel (%p193) target = $region24
        $region23: #{tpu_custom_call.1} parent=11 // pred_region
          _
        $region24: #{tpu_custom_call.1} parent=11 // pred_fallthru
          _
        // Predicated region
        $region25: #{tpu_custom_call.1} parent=11 // pred_check
          %p196 = pneg %p125
        $region26: #{tpu_custom_call.1} parent=11 // pred_check_branch
          %198 = sbr.rel (%p196) target = $region28
        $region27: #{tpu_custom_call.1} parent=11 // pred_region
          _
        $region28: #{tpu_custom_call.1} parent=11 // pred_fallthru
          _
        // Predicated region
        $region29: #{tpu_custom_call.1} parent=11 // pred_check
          %p199 = pneg %p146
        $region30: #{tpu_custom_call.1} parent=11 // pred_check_branch
          %201 = sbr.rel (%p199) target = $region32
        $region31: #{tpu_custom_call.1} parent=11 // pred_region
          _
        $region32: #{tpu_custom_call.1} parent=11 // pred_fallthru
          _
      $region12: #{tpu_custom_call.1} parent=5 // pred_fallthru
        _
      %p202 = scmp.lt.s32.totalorder %s15, 2
      // Predicated region
      $region33: #{tpu_custom_call.1} parent=5 // pred_check
        %p203 = pneg %p202
      $region34: #{tpu_custom_call.1} parent=5 // pred_check_branch
        %205 = sbr.rel (%p203) target = $region36
      $region35: #{tpu_custom_call.1} parent=5 // pred_region
        // Predicated region
        $region37: #{tpu_custom_call.1} parent=35 // pred_check
          %p206 = pneg %p35
        $region38: #{tpu_custom_call.1} parent=35 // pred_check_branch
          %208 = sbr.rel (%p206) target = $region40
        $region39: #{tpu_custom_call.1} parent=35 // pred_region
          %s209 = smul.u32 16, %s15
          %p210 = scmp.lt.s32.totalorder %s209, 31
          %s211 = scalar_select %p210, %s209, 31
          %s212 = smul.addr %s211, 8
          %s213 = scalar_lea.vmem %s0, %s212
          %s214 = smul.u32 16, %s15
        $region40: #{tpu_custom_call.1} parent=35 // pred_fallthru
          _
      $region36: #{tpu_custom_call.1} parent=5 // pred_fallthru
        _
      %p215 = scmp.le.s32.totalorder 1, %s15
      %p216 = scmp.lt.s32.totalorder %s15, 3
      %p217 = pnand %p215, %p216
      %p218 = pneg %p217
      // Predicated region
      $region41: #{tpu_custom_call.1} parent=5 // pred_check
        _
      $region42: #{tpu_custom_call.1} parent=5 // pred_check_branch
        %220 = sbr.rel (%p217) target = $region44
      $region43: #{tpu_custom_call.1} parent=5 // pred_region
        %s221 = ssub.s32 %s15, 1
        %s222 = smul.u32 16, %s20
        %p223 = scmp.lt.s32.totalorder %s222, 31
        %s224 = scalar_select %p223, %s222, 31
        %s225 = smul.addr %s224, 8
        %s226 = scalar_lea.vmem %s0, %s225
        %p227 = pneg %p41
        %p228 = pneg %p38
        %p229 = pneg %p62
        %p230 = pneg %p59
        %p231 = pneg %p83
        %p232 = pneg %p80
        %p233 = pneg %p104
        %p234 = pneg %p101
        %p235 = pneg %p125
        %p236 = pneg %p122
        %p237 = pneg %p146
        %p238 = pneg %p143
        %p239 = pneg %p172
        %p240 = pneg %p169
        %s241 = sand.u32 %s159, 1
        %s242 = scalar_lea.sflag [#allocation4], %s241
        %s243 = sand.u32 %s159, 1
        %s244 = smul.addr %s243, 128
        %s245 = scalar_lea.vmem [#allocation3], %s244
        %s246 = smul.u32 16, %s20
        %p247 = scmp.lt.s32.totalorder %s246, 31
        %s248 = scalar_select %p247, %s246, 31
        %s249 = smul.addr %s248, 8
        %s250 = scalar_lea.vmem %s0, %s249
        %s251 = smul.u32 16, %s20
        %s252 = smul.u32 16, %s20
        %v253 = vld [vmem:[%s250] sm:$0xff]
        %v254 = vld [vmem:[%s250 + $0x8] sm:$0xff]
        %v255 = vld [vmem:[%s250 + $0x10] sm:$0xff]
        %v256 = vld [vmem:[%s250 + $0x18] sm:$0xff]
        %v257 = vld [vmem:[%s250 + $0x20] sm:$0xff]
        %v258 = vld [vmem:[%s250 + $0x28] sm:$0xff]
        %v259 = vld [vmem:[%s250 + $0x30] sm:$0xff]
        %v260 = vld [vmem:[%s250 + $0x38] sm:$0xff]
        %v261 = vld [vmem:[%s250 + $0x40] sm:$0xff]
        %v262 = vld [vmem:[%s250 + $0x48] sm:$0xff]
        %v263 = vld [vmem:[%s250 + $0x50] sm:$0xff]
        %v264 = vld [vmem:[%s250 + $0x58] sm:$0xff]
        %v265 = vld [vmem:[%s250 + $0x60] sm:$0xff]
        %v266 = vld [vmem:[%s250 + $0x68] sm:$0xff]
        %v267 = vld [vmem:[%s250 + $0x70] sm:$0xff]
        %v268 = vld [vmem:[%s250 + $0x78] sm:$0xff]
        %v269 = vlaneseq
        %v270 = vand.u32 %v269, 127
        %271 = vset.pattern.permute.xlu0 0
        %272 = vperm.xlu0 %271, %v253
        %v273 = vpop.permute.xlu0 %272
        %274 = vset.pattern.permute.xlu0 0
        %275 = vperm.xlu0 %274, %v254
        %v276 = vpop.permute.xlu0 %275
        %277 = vset.pattern.permute.xlu0 0
        %278 = vperm.xlu0 %277, %v255
        %v279 = vpop.permute.xlu0 %278
        %280 = vset.pattern.permute.xlu0 0
        %281 = vperm.xlu0 %280, %v256
        %v282 = vpop.permute.xlu0 %281
        %283 = vset.pattern.permute.xlu0 0
        %284 = vperm.xlu0 %283, %v257
        %v285 = vpop.permute.xlu0 %284
        %286 = vset.pattern.permute.xlu0 0
        %287 = vperm.xlu0 %286, %v258
        %v288 = vpop.permute.xlu0 %287
        %289 = vset.pattern.permute.xlu0 0
        %290 = vperm.xlu0 %289, %v259
        %v291 = vpop.permute.xlu0 %290
        %292 = vset.pattern.permute.xlu0 0
        %293 = vperm.xlu0 %292, %v260
        %v294 = vpop.permute.xlu0 %293
        %295 = vset.pattern.permute.xlu0 0
        %296 = vperm.xlu0 %295, %v261
        %v297 = vpop.permute.xlu0 %296
        %298 = vset.pattern.permute.xlu0 0
        %299 = vperm.xlu0 %298, %v262
        %v300 = vpop.permute.xlu0 %299
        %301 = vset.pattern.permute.xlu0 0
        %302 = vperm.xlu0 %301, %v263
        %v303 = vpop.permute.xlu0 %302
        %304 = vset.pattern.permute.xlu0 0
        %305 = vperm.xlu0 %304, %v264
        %v306 = vpop.permute.xlu0 %305
        %307 = vset.pattern.permute.xlu0 0
        %308 = vperm.xlu0 %307, %v265
        %v309 = vpop.permute.xlu0 %308
        %310 = vset.pattern.permute.xlu0 0
        %311 = vperm.xlu0 %310, %v266
        %v312 = vpop.permute.xlu0 %311
        %313 = vset.pattern.permute.xlu0 0
        %314 = vperm.xlu0 %313, %v267
        %v315 = vpop.permute.xlu0 %314
        %316 = vset.pattern.permute.xlu0 0
        %317 = vperm.xlu0 %316, %v268
        %v318 = vpop.permute.xlu0 %317
        %vm319 = vcmp.eq.s32.totalorder %v273, %v270
        %vm320 = vcmp.eq.s32.totalorder %v276, %v270
        %vm321 = vcmp.eq.s32.totalorder %v279, %v270
        %vm322 = vcmp.eq.s32.totalorder %v282, %v270
        %vm323 = vcmp.eq.s32.totalorder %v285, %v270
        %vm324 = vcmp.eq.s32.totalorder %v288, %v270
        %vm325 = vcmp.eq.s32.totalorder %v291, %v270
        %vm326 = vcmp.eq.s32.totalorder %v294, %v270
        %vm327 = vcmp.eq.s32.totalorder %v297, %v270
        %vm328 = vcmp.eq.s32.totalorder %v300, %v270
        %vm329 = vcmp.eq.s32.totalorder %v303, %v270
        %vm330 = vcmp.eq.s32.totalorder %v306, %v270
        %vm331 = vcmp.eq.s32.totalorder %v309, %v270
        %vm332 = vcmp.eq.s32.totalorder %v312, %v270
        %vm333 = vcmp.eq.s32.totalorder %v315, %v270
        %vm334 = vcmp.eq.s32.totalorder %v318, %v270
        %v335 = vsel %vm319, 1, 0
        %v336 = vsel %vm320, 1, 0
        %v337 = vsel %vm321, 1, 0
        %v338 = vsel %vm322, 1, 0
        %v339 = vsel %vm323, 1, 0
        %v340 = vsel %vm324, 1, 0
        %v341 = vsel %vm325, 1, 0
        %v342 = vsel %vm326, 1, 0
        %v343 = vsel %vm327, 1, 0
        %v344 = vsel %vm328, 1, 0
        %v345 = vsel %vm329, 1, 0
        %v346 = vsel %vm330, 1, 0
        %v347 = vsel %vm331, 1, 0
        %v348 = vsel %vm332, 1, 0
        %v349 = vsel %vm333, 1, 0
        %v350 = vsel %vm334, 1, 0
        %v351 = vcvt.s32.f32 %v335
        %v352 = vcvt.s32.f32 %v336
        %v353 = vcvt.s32.f32 %v337
        %v354 = vcvt.s32.f32 %v338
        %v355 = vcvt.s32.f32 %v339
        %v356 = vcvt.s32.f32 %v340
        %v357 = vcvt.s32.f32 %v341
        %v358 = vcvt.s32.f32 %v342
        %v359 = vcvt.s32.f32 %v343
        %v360 = vcvt.s32.f32 %v344
        %v361 = vcvt.s32.f32 %v345
        %v362 = vcvt.s32.f32 %v346
        %v363 = vcvt.s32.f32 %v347
        %v364 = vcvt.s32.f32 %v348
        %v365 = vcvt.s32.f32 %v349
        %v366 = vcvt.s32.f32 %v350
        %v367 = vld [vmem:[%s1] sm:$0xff]
        %v368 = vld [vmem:[%s1 + $0x8] sm:$0xff]
        %v369 = vld [vmem:[%s1 + $0x10] sm:$0xff]
        %v370 = vld [vmem:[%s1 + $0x18] sm:$0xff]
        %v371 = vld [vmem:[%s1 + $0x20] sm:$0xff]
        %v372 = vld [vmem:[%s1 + $0x28] sm:$0xff]
        %v373 = vld [vmem:[%s1 + $0x30] sm:$0xff]
        %v374 = vld [vmem:[%s1 + $0x38] sm:$0xff]
        %v375 = vld [vmem:[%s1 + $0x40] sm:$0xff]
        %v376 = vld [vmem:[%s1 + $0x48] sm:$0xff]
        %v377 = vld [vmem:[%s1 + $0x50] sm:$0xff]
        %v378 = vld [vmem:[%s1 + $0x58] sm:$0xff]
        %v379 = vld [vmem:[%s1 + $0x60] sm:$0xff]
        %v380 = vld [vmem:[%s1 + $0x68] sm:$0xff]
        %v381 = vld [vmem:[%s1 + $0x70] sm:$0xff]
        %v382 = vld [vmem:[%s1 + $0x78] sm:$0xff]
        %383 = vmatprep.subr.mxu0 0.0
        %384 = vmatpush1.msra.mxu0 %v382
        %385 = vmatprep.subr.mxu0 0.0
        %386 = vmatpush1.msra.mxu0 %v381
        %387 = vmatprep.subr.mxu0 0.0
        %388 = vmatpush1.msra.mxu0 %v380
        %389 = vmatprep.subr.mxu0 0.0
        %390 = vmatpush1.msra.mxu0 %v379
        %391 = vmatprep.subr.mxu0 0.0
        %392 = vmatpush1.msra.mxu0 %v378
        %393 = vmatprep.subr.mxu0 0.0
        %394 = vmatpush1.msra.mxu0 %v377
        %395 = vmatprep.subr.mxu0 0.0
        %396 = vmatpush1.msra.mxu0 %v376
        %397 = vmatprep.subr.mxu0 0.0
        %398 = vmatpush1.msra.mxu0 %v375
        %399 = vmatprep.subr.mxu0 0.0
        %400 = vmatpush1.msra.mxu0 %v374
        %401 = vmatprep.subr.mxu0 0.0
        %402 = vmatpush1.msra.mxu0 %v373
        %403 = vmatprep.subr.mxu0 0.0
        %404 = vmatpush1.msra.mxu0 %v372
        %405 = vmatprep.subr.mxu0 0.0
        %406 = vmatpush1.msra.mxu0 %v371
        %407 = vmatprep.subr.mxu0 0.0
        %408 = vmatpush1.msra.mxu0 %v370
        %409 = vmatprep.subr.mxu0 0.0
        %410 = vmatpush1.msra.mxu0 %v369
        %411 = vmatprep.subr.mxu0 0.0
        %412 = vmatpush1.msra.mxu0 %v368
        %413 = vmatprep.subr.mxu0 0.0
        %414 = vmatpush1.msra.mxu0 %v367
        %415 = vmatprep.subr.mxu0 0.0
        %416 = vmatpush2.msra.mxu0 0.0
        %417 = vmatprep.subr.mxu0 0.0
        %418 = vmatpush2.msra.mxu0 0.0
        %419 = vmatprep.subr.mxu0 0.0
        %420 = vmatpush2.msra.mxu0 0.0
        %421 = vmatprep.subr.mxu0 0.0
        %422 = vmatpush2.msra.mxu0 0.0
        %423 = vmatprep.subr.mxu0 0.0
        %424 = vmatpush2.msra.mxu0 0.0
        %425 = vmatprep.subr.mxu0 0.0
        %426 = vmatpush2.msra.mxu0 0.0
        %427 = vmatprep.subr.mxu0 0.0
        %428 = vmatpush2.msra.mxu0 0.0
        %429 = vmatprep.subr.mxu0 0.0
        %430 = vmatpush2.msra.mxu0 0.0
        %431 = vmatprep.subr.mxu0 0.0
        %432 = vmatpush2.msra.mxu0 0.0
        %433 = vmatprep.subr.mxu0 0.0
        %434 = vmatpush2.msra.mxu0 0.0
        %435 = vmatprep.subr.mxu0 0.0
        %436 = vmatpush2.msra.mxu0 0.0
        %437 = vmatprep.subr.mxu0 0.0
        %438 = vmatpush2.msra.mxu0 0.0
        %439 = vmatprep.subr.mxu0 0.0
        %440 = vmatpush2.msra.mxu0 0.0
        %441 = vmatprep.subr.mxu0 0.0
        %442 = vmatpush2.msra.mxu0 0.0
        %443 = vmatprep.subr.mxu0 0.0
        %444 = vmatpush2.msra.mxu0 0.0
        %445 = vmatprep.subr.mxu0 0.0
        %446 = vmatpush2.msra.mxu0 0.0
        %447 = vmatprep.mubr.f32.mxu0 0.0
        %448 = vmatmul.mubr.f32.gmra.mxu0 %v351
        %v449 = vpop.f32.mrf.mxu0
        %v450 = vadd.f32 0.0, %v449
        %v451 = vpop.f32.mrf.mxu0
        %452 = vmatprep.mubr.f32.mxu0 0.0
        %453 = vmatmul.mubr.f32.gmra.mxu0 %v352
        %v454 = vpop.f32.mrf.mxu0
        %v455 = vadd.f32 0.0, %v454
        %v456 = vpop.f32.mrf.mxu0
        %457 = vmatprep.mubr.f32.mxu0 0.0
        %458 = vmatmul.mubr.f32.gmra.mxu0 %v353
        %v459 = vpop.f32.mrf.mxu0
        %v460 = vadd.f32 0.0, %v459
        %v461 = vpop.f32.mrf.mxu0
        %462 = vmatprep.mubr.f32.mxu0 0.0
        %463 = vmatmul.mubr.f32.gmra.mxu0 %v354
        %v464 = vpop.f32.mrf.mxu0
        %v465 = vadd.f32 0.0, %v464
        %v466 = vpop.f32.mrf.mxu0
        %467 = vmatprep.mubr.f32.mxu0 0.0
        %468 = vmatmul.mubr.f32.gmra.mxu0 %v355
        %v469 = vpop.f32.mrf.mxu0
        %v470 = vadd.f32 0.0, %v469
        %v471 = vpop.f32.mrf.mxu0
        %472 = vmatprep.mubr.f32.mxu0 0.0
        %473 = vmatmul.mubr.f32.gmra.mxu0 %v356
        %v474 = vpop.f32.mrf.mxu0
        %v475 = vadd.f32 0.0, %v474
        %v476 = vpop.f32.mrf.mxu0
        %477 = vmatprep.mubr.f32.mxu0 0.0
        %478 = vmatmul.mubr.f32.gmra.mxu0 %v357
        %v479 = vpop.f32.mrf.mxu0
        %v480 = vadd.f32 0.0, %v479
        %v481 = vpop.f32.mrf.mxu0
        %482 = vmatprep.mubr.f32.mxu0 0.0
        %483 = vmatmul.mubr.f32.gmra.mxu0 %v358
        %v484 = vpop.f32.mrf.mxu0
        %v485 = vadd.f32 0.0, %v484
        %v486 = vpop.f32.mrf.mxu0
        %487 = vmatprep.mubr.f32.mxu0 0.0
        %488 = vmatmul.mubr.f32.gmra.mxu0 %v359
        %v489 = vpop.f32.mrf.mxu0
        %v490 = vadd.f32 0.0, %v489
        %v491 = vpop.f32.mrf.mxu0
        %492 = vmatprep.mubr.f32.mxu0 0.0
        %493 = vmatmul.mubr.f32.gmra.mxu0 %v360
        %v494 = vpop.f32.mrf.mxu0
        %v495 = vadd.f32 0.0, %v494
        %v496 = vpop.f32.mrf.mxu0
        %497 = vmatprep.mubr.f32.mxu0 0.0
        %498 = vmatmul.mubr.f32.gmra.mxu0 %v361
        %v499 = vpop.f32.mrf.mxu0
        %v500 = vadd.f32 0.0, %v499
        %v501 = vpop.f32.mrf.mxu0
        %502 = vmatprep.mubr.f32.mxu0 0.0
        %503 = vmatmul.mubr.f32.gmra.mxu0 %v362
        %v504 = vpop.f32.mrf.mxu0
        %v505 = vadd.f32 0.0, %v504
        %v506 = vpop.f32.mrf.mxu0
        %507 = vmatprep.mubr.f32.mxu0 0.0
        %508 = vmatmul.mubr.f32.gmra.mxu0 %v363
        %v509 = vpop.f32.mrf.mxu0
        %v510 = vadd.f32 0.0, %v509
        %v511 = vpop.f32.mrf.mxu0
        %512 = vmatprep.mubr.f32.mxu0 0.0
        %513 = vmatmul.mubr.f32.gmra.mxu0 %v364
        %v514 = vpop.f32.mrf.mxu0
        %v515 = vadd.f32 0.0, %v514
        %v516 = vpop.f32.mrf.mxu0
        %517 = vmatprep.mubr.f32.mxu0 0.0
        %518 = vmatmul.mubr.f32.gmra.mxu0 %v365
        %v519 = vpop.f32.mrf.mxu0
        %v520 = vadd.f32 0.0, %v519
        %v521 = vpop.f32.mrf.mxu0
        %522 = vmatprep.mubr.f32.mxu0 0.0
        %523 = vmatmul.mubr.f32.gmra.mxu0 %v366
        %v524 = vpop.f32.mrf.mxu0
        %v525 = vadd.f32 0.0, %v524
        %v526 = vpop.f32.mrf.mxu0
        %527 = vdwg.mxu0
        %vm528 = vcmask 130048
        %529 = vst.msk [vmem:[#allocation2] sm:$0xff] %vm528, %v450
        %530 = vst.msk [vmem:[#allocation2 + $0x8] sm:$0xff] %vm528, %v455
        %531 = vst.msk [vmem:[#allocation2 + $0x10] sm:$0xff] %vm528, %v460
        %532 = vst.msk [vmem:[#allocation2 + $0x18] sm:$0xff] %vm528, %v465
        %533 = vst.msk [vmem:[#allocation2 + $0x20] sm:$0xff] %vm528, %v470
        %534 = vst.msk [vmem:[#allocation2 + $0x28] sm:$0xff] %vm528, %v475
        %535 = vst.msk [vmem:[#allocation2 + $0x30] sm:$0xff] %vm528, %v480
        %536 = vst.msk [vmem:[#allocation2 + $0x38] sm:$0xff] %vm528, %v485
        %537 = vst.msk [vmem:[#allocation2 + $0x40] sm:$0xff] %vm528, %v490
        %538 = vst.msk [vmem:[#allocation2 + $0x48] sm:$0xff] %vm528, %v495
        %539 = vst.msk [vmem:[#allocation2 + $0x50] sm:$0xff] %vm528, %v500
        %540 = vst.msk [vmem:[#allocation2 + $0x58] sm:$0xff] %vm528, %v505
        %541 = vst.msk [vmem:[#allocation2 + $0x60] sm:$0xff] %vm528, %v510
        %542 = vst.msk [vmem:[#allocation2 + $0x68] sm:$0xff] %vm528, %v515
        %543 = vst.msk [vmem:[#allocation2 + $0x70] sm:$0xff] %vm528, %v520
        %544 = vst.msk [vmem:[#allocation2 + $0x78] sm:$0xff] %vm528, %v525
        %545 = vset.pattern.permute.xlu0 1
        %546 = vperm.xlu0 %545, %v253
        %v547 = vpop.permute.xlu0 %546
        %548 = vset.pattern.permute.xlu0 1
        %549 = vperm.xlu0 %548, %v254
        %v550 = vpop.permute.xlu0 %549
        %551 = vset.pattern.permute.xlu0 1
        %552 = vperm.xlu0 %551, %v255
        %v553 = vpop.permute.xlu0 %552
        %554 = vset.pattern.permute.xlu0 1
        %555 = vperm.xlu0 %554, %v256
        %v556 = vpop.permute.xlu0 %555
        %557 = vset.pattern.permute.xlu0 1
        %558 = vperm.xlu0 %557, %v257
        %v559 = vpop.permute.xlu0 %558
        %560 = vset.pattern.permute.xlu0 1
        %561 = vperm.xlu0 %560, %v258
        %v562 = vpop.permute.xlu0 %561
        %563 = vset.pattern.permute.xlu0 1
        %564 = vperm.xlu0 %563, %v259
        %v565 = vpop.permute.xlu0 %564
        %566 = vset.pattern.permute.xlu0 1
        %567 = vperm.xlu0 %566, %v260
        %v568 = vpop.permute.xlu0 %567
        %569 = vset.pattern.permute.xlu0 1
        %570 = vperm.xlu0 %569, %v261
        %v571 = vpop.permute.xlu0 %570
        %572 = vset.pattern.permute.xlu0 1
        %573 = vperm.xlu0 %572, %v262
        %v574 = vpop.permute.xlu0 %573
        %575 = vset.pattern.permute.xlu0 1
        %576 = vperm.xlu0 %575, %v263
        %v577 = vpop.permute.xlu0 %576
        %578 = vset.pattern.permute.xlu0 1
        %579 = vperm.xlu0 %578, %v264
        %v580 = vpop.permute.xlu0 %579
        %581 = vset.pattern.permute.xlu0 1
        %582 = vperm.xlu0 %581, %v265
        %v583 = vpop.permute.xlu0 %582
        %584 = vset.pattern.permute.xlu0 1
        %585 = vperm.xlu0 %584, %v266
        %v586 = vpop.permute.xlu0 %585
        %587 = vset.pattern.permute.xlu0 1
        %588 = vperm.xlu0 %587, %v267
        %v589 = vpop.permute.xlu0 %588
        %590 = vset.pattern.permute.xlu0 1
        %591 = vperm.xlu0 %590, %v268
        %v592 = vpop.permute.xlu0 %591
        %vm593 = vcmp.eq.s32.totalorder %v547, %v270
        %vm594 = vcmp.eq.s32.totalorder %v550, %v270
        %vm595 = vcmp.eq.s32.totalorder %v553, %v270
        %vm596 = vcmp.eq.s32.totalorder %v556, %v270
        %vm597 = vcmp.eq.s32.totalorder %v559, %v270
        %vm598 = vcmp.eq.s32.totalorder %v562, %v270
        %vm599 = vcmp.eq.s32.totalorder %v565, %v270
        %vm600 = vcmp.eq.s32.totalorder %v568, %v270
        %vm601 = vcmp.eq.s32.totalorder %v571, %v270
        %vm602 = vcmp.eq.s32.totalorder %v574, %v270
        %vm603 = vcmp.eq.s32.totalorder %v577, %v270
        %vm604 = vcmp.eq.s32.totalorder %v580, %v270
        %vm605 = vcmp.eq.s32.totalorder %v583, %v270
        %vm606 = vcmp.eq.s32.totalorder %v586, %v270
        %vm607 = vcmp.eq.s32.totalorder %v589, %v270
        %vm608 = vcmp.eq.s32.totalorder %v592, %v270
        %v609 = vsel %vm593, 1, 0
        %v610 = vsel %vm594, 1, 0
        %v611 = vsel %vm595, 1, 0
        %v612 = vsel %vm596, 1, 0
        %v613 = vsel %vm597, 1, 0
        %v614 = vsel %vm598, 1, 0
        %v615 = vsel %vm599, 1, 0
        %v616 = vsel %vm600, 1, 0
        %v617 = vsel %vm601, 1, 0
        %v618 = vsel %vm602, 1, 0
        %v619 = vsel %vm603, 1, 0
        %v620 = vsel %vm604, 1, 0
        %v621 = vsel %vm605, 1, 0
        %v622 = vsel %vm606, 1, 0
        %v623 = vsel %vm607, 1, 0
        %v624 = vsel %vm608, 1, 0
        %v625 = vcvt.s32.f32 %v609
        %v626 = vcvt.s32.f32 %v610
        %v627 = vcvt.s32.f32 %v611
        %v628 = vcvt.s32.f32 %v612
        %v629 = vcvt.s32.f32 %v613
        %v630 = vcvt.s32.f32 %v614
        %v631 = vcvt.s32.f32 %v615
        %v632 = vcvt.s32.f32 %v616
        %v633 = vcvt.s32.f32 %v617
        %v634 = vcvt.s32.f32 %v618
        %v635 = vcvt.s32.f32 %v619
        %v636 = vcvt.s32.f32 %v620
        %v637 = vcvt.s32.f32 %v621
        %v638 = vcvt.s32.f32 %v622
        %v639 = vcvt.s32.f32 %v623
        %v640 = vcvt.s32.f32 %v624
        %v641 = vld [vmem:[%s1] sm:$0xff]
        %v642 = vld [vmem:[%s1 + $0x8] sm:$0xff]
        %v643 = vld [vmem:[%s1 + $0x10] sm:$0xff]
        %v644 = vld [vmem:[%s1 + $0x18] sm:$0xff]
        %v645 = vld [vmem:[%s1 + $0x20] sm:$0xff]
        %v646 = vld [vmem:[%s1 + $0x28] sm:$0xff]
        %v647 = vld [vmem:[%s1 + $0x30] sm:$0xff]
        %v648 = vld [vmem:[%s1 + $0x38] sm:$0xff]
        %v649 = vld [vmem:[%s1 + $0x40] sm:$0xff]
        %v650 = vld [vmem:[%s1 + $0x48] sm:$0xff]
        %v651 = vld [vmem:[%s1 + $0x50] sm:$0xff]
        %v652 = vld [vmem:[%s1 + $0x58] sm:$0xff]
        %v653 = vld [vmem:[%s1 + $0x60] sm:$0xff]
        %v654 = vld [vmem:[%s1 + $0x68] sm:$0xff]
        %v655 = vld [vmem:[%s1 + $0x70] sm:$0xff]
        %v656 = vld [vmem:[%s1 + $0x78] sm:$0xff]
        %657 = vmatprep.subr.mxu0 0.0
        %658 = vmatpush1.msra.mxu0 %v656
        %659 = vmatprep.subr.mxu0 0.0
        %660 = vmatpush1.msra.mxu0 %v655
        %661 = vmatprep.subr.mxu0 0.0
        %662 = vmatpush1.msra.mxu0 %v654
        %663 = vmatprep.subr.mxu0 0.0
        %664 = vmatpush1.msra.mxu0 %v653
        %665 = vmatprep.subr.mxu0 0.0
        %666 = vmatpush1.msra.mxu0 %v652
        %667 = vmatprep.subr.mxu0 0.0
        %668 = vmatpush1.msra.mxu0 %v651
        %669 = vmatprep.subr.mxu0 0.0
        %670 = vmatpush1.msra.mxu0 %v650
        %671 = vmatprep.subr.mxu0 0.0
        %672 = vmatpush1.msra.mxu0 %v649
        %673 = vmatprep.subr.mxu0 0.0
        %674 = vmatpush1.msra.mxu0 %v648
        %675 = vmatprep.subr.mxu0 0.0
        %676 = vmatpush1.msra.mxu0 %v647
        %677 = vmatprep.subr.mxu0 0.0
        %678 = vmatpush1.msra.mxu0 %v646
        %679 = vmatprep.subr.mxu0 0.0
        %680 = vmatpush1.msra.mxu0 %v645
        %681 = vmatprep.subr.mxu0 0.0
        %682 = vmatpush1.msra.mxu0 %v644
        %683 = vmatprep.subr.mxu0 0.0
        %684 = vmatpush1.msra.mxu0 %v643
        %685 = vmatprep.subr.mxu0 0.0
        %686 = vmatpush1.msra.mxu0 %v642
        %687 = vmatprep.subr.mxu0 0.0
        %688 = vmatpush1.msra.mxu0 %v641
        %689 = vmatprep.subr.mxu0 0.0
        %690 = vmatpush2.msra.mxu0 0.0
        %691 = vmatprep.subr.mxu0 0.0
        %692 = vmatpush2.msra.mxu0 0.0
        %693 = vmatprep.subr.mxu0 0.0
        %694 = vmatpush2.msra.mxu0 0.0
        %695 = vmatprep.subr.mxu0 0.0
        %696 = vmatpush2.msra.mxu0 0.0
        %697 = vmatprep.subr.mxu0 0.0
        %698 = vmatpush2.msra.mxu0 0.0
        %699 = vmatprep.subr.mxu0 0.0
        %700 = vmatpush2.msra.mxu0 0.0
        %701 = vmatprep.subr.mxu0 0.0
        %702 = vmatpush2.msra.mxu0 0.0
        %703 = vmatprep.subr.mxu0 0.0
        %704 = vmatpush2.msra.mxu0 0.0
        %705 = vmatprep.subr.mxu0 0.0
        %706 = vmatpush2.msra.mxu0 0.0
        %707 = vmatprep.subr.mxu0 0.0
        %708 = vmatpush2.msra.mxu0 0.0
        %709 = vmatprep.subr.mxu0 0.0
        %710 = vmatpush2.msra.mxu0 0.0
        %711 = vmatprep.subr.mxu0 0.0
        %712 = vmatpush2.msra.mxu0 0.0
        %713 = vmatprep.subr.mxu0 0.0
        %714 = vmatpush2.msra.mxu0 0.0
        %715 = vmatprep.subr.mxu0 0.0
        %716 = vmatpush2.msra.mxu0 0.0
        %717 = vmatprep.subr.mxu0 0.0
        %718 = vmatpush2.msra.mxu0 0.0
        %719 = vmatprep.subr.mxu0 0.0
        %720 = vmatpush2.msra.mxu0 0.0
        %721 = vmatprep.mubr.f32.mxu0 0.0
        %722 = vmatmul.mubr.f32.gmra.mxu0 %v625
        %v723 = vpop.f32.mrf.mxu0
        %v724 = vadd.f32 0.0, %v723
        %v725 = vpop.f32.mrf.mxu0
        %726 = vmatprep.mubr.f32.mxu0 0.0
        %727 = vmatmul.mubr.f32.gmra.mxu0 %v626
        %v728 = vpop.f32.mrf.mxu0
        %v729 = vadd.f32 0.0, %v728
        %v730 = vpop.f32.mrf.mxu0
        %731 = vmatprep.mubr.f32.mxu0 0.0
        %732 = vmatmul.mubr.f32.gmra.mxu0 %v627
        %v733 = vpop.f32.mrf.mxu0
        %v734 = vadd.f32 0.0, %v733
        %v735 = vpop.f32.mrf.mxu0
        %736 = vmatprep.mubr.f32.mxu0 0.0
        %737 = vmatmul.mubr.f32.gmra.mxu0 %v628
        %v738 = vpop.f32.mrf.mxu0
        %v739 = vadd.f32 0.0, %v738
        %v740 = vpop.f32.mrf.mxu0
        %741 = vmatprep.mubr.f32.mxu0 0.0
        %742 = vmatmul.mubr.f32.gmra.mxu0 %v629
        %v743 = vpop.f32.mrf.mxu0
        %v744 = vadd.f32 0.0, %v743
        %v745 = vpop.f32.mrf.mxu0
        %746 = vmatprep.mubr.f32.mxu0 0.0
        %747 = vmatmul.mubr.f32.gmra.mxu0 %v630
        %v748 = vpop.f32.mrf.mxu0
        %v749 = vadd.f32 0.0, %v748
        %v750 = vpop.f32.mrf.mxu0
        %751 = vmatprep.mubr.f32.mxu0 0.0
        %752 = vmatmul.mubr.f32.gmra.mxu0 %v631
        %v753 = vpop.f32.mrf.mxu0
        %v754 = vadd.f32 0.0, %v753
        %v755 = vpop.f32.mrf.mxu0
        %756 = vmatprep.mubr.f32.mxu0 0.0
        %757 = vmatmul.mubr.f32.gmra.mxu0 %v632
        %v758 = vpop.f32.mrf.mxu0
        %v759 = vadd.f32 0.0, %v758
        %v760 = vpop.f32.mrf.mxu0
        %761 = vmatprep.mubr.f32.mxu0 0.0
        %762 = vmatmul.mubr.f32.gmra.mxu0 %v633
        %v763 = vpop.f32.mrf.mxu0
        %v764 = vadd.f32 0.0, %v763
        %v765 = vpop.f32.mrf.mxu0
        %766 = vmatprep.mubr.f32.mxu0 0.0
        %767 = vmatmul.mubr.f32.gmra.mxu0 %v634
        %v768 = vpop.f32.mrf.mxu0
        %v769 = vadd.f32 0.0, %v768
        %v770 = vpop.f32.mrf.mxu0
        %771 = vmatprep.mubr.f32.mxu0 0.0
        %772 = vmatmul.mubr.f32.gmra.mxu0 %v635
        %v773 = vpop.f32.mrf.mxu0
        %v774 = vadd.f32 0.0, %v773
        %v775 = vpop.f32.mrf.mxu0
        %776 = vmatprep.mubr.f32.mxu0 0.0
        %777 = vmatmul.mubr.f32.gmra.mxu0 %v636
        %v778 = vpop.f32.mrf.mxu0
        %v779 = vadd.f32 0.0, %v778
        %v780 = vpop.f32.mrf.mxu0
        %781 = vmatprep.mubr.f32.mxu0 0.0
        %782 = vmatmul.mubr.f32.gmra.mxu0 %v637
        %v783 = vpop.f32.mrf.mxu0
        %v784 = vadd.f32 0.0, %v783
        %v785 = vpop.f32.mrf.mxu0
        %786 = vmatprep.mubr.f32.mxu0 0.0
        %787 = vmatmul.mubr.f32.gmra.mxu0 %v638
        %v788 = vpop.f32.mrf.mxu0
        %v789 = vadd.f32 0.0, %v788
        %v790 = vpop.f32.mrf.mxu0
        %791 = vmatprep.mubr.f32.mxu0 0.0
        %792 = vmatmul.mubr.f32.gmra.mxu0 %v639
        %v793 = vpop.f32.mrf.mxu0
        %v794 = vadd.f32 0.0, %v793
        %v795 = vpop.f32.mrf.mxu0
        %796 = vmatprep.mubr.f32.mxu0 0.0
        %797 = vmatmul.mubr.f32.gmra.mxu0 %v640
        %v798 = vpop.f32.mrf.mxu0
        %v799 = vadd.f32 0.0, %v798
        %v800 = vpop.f32.mrf.mxu0
        %801 = vdwg.mxu0
        %818 = vrot.lane.b32.xlu0 %v724, 16
        %v819 = vpop.permute.xlu0 %818
        %820 = vrot.lane.b32.xlu0 %v729, 16
        %v821 = vpop.permute.xlu0 %820
        %822 = vrot.lane.b32.xlu0 %v734, 16
        %v823 = vpop.permute.xlu0 %822
        %824 = vrot.lane.b32.xlu0 %v739, 16
        %v825 = vpop.permute.xlu0 %824
        %826 = vrot.lane.b32.xlu0 %v744, 16
        %v827 = vpop.permute.xlu0 %826
        %828 = vrot.lane.b32.xlu0 %v749, 16
        %v829 = vpop.permute.xlu0 %828
        %830 = vrot.lane.b32.xlu0 %v754, 16
        %v831 = vpop.permute.xlu0 %830
        %832 = vrot.lane.b32.xlu0 %v759, 16
        %v833 = vpop.permute.xlu0 %832
        %834 = vrot.lane.b32.xlu0 %v764, 16
        %v835 = vpop.permute.xlu0 %834
        %836 = vrot.lane.b32.xlu0 %v769, 16
        %v837 = vpop.permute.xlu0 %836
        %838 = vrot.lane.b32.xlu0 %v774, 16
        %v839 = vpop.permute.xlu0 %838
        %840 = vrot.lane.b32.xlu0 %v779, 16
        %v841 = vpop.permute.xlu0 %840
        %842 = vrot.lane.b32.xlu0 %v784, 16
        %v843 = vpop.permute.xlu0 %842
        %844 = vrot.lane.b32.xlu0 %v789, 16
        %v845 = vpop.permute.xlu0 %844
        %846 = vrot.lane.b32.xlu0 %v794, 16
        %v847 = vpop.permute.xlu0 %846
        %848 = vrot.lane.b32.xlu0 %v799, 16
        %v849 = vpop.permute.xlu0 %848
        %vm866 = vcmask 261248
        %867 = vst.msk [vmem:[#allocation2] sm:$0xff] %vm866, %v819
        %868 = vst.msk [vmem:[#allocation2 + $0x8] sm:$0xff] %vm866, %v821
        %869 = vst.msk [vmem:[#allocation2 + $0x10] sm:$0xff] %vm866, %v823
        %870 = vst.msk [vmem:[#allocation2 + $0x18] sm:$0xff] %vm866, %v825
        %871 = vst.msk [vmem:[#allocation2 + $0x20] sm:$0xff] %vm866, %v827
        %872 = vst.msk [vmem:[#allocation2 + $0x28] sm:$0xff] %vm866, %v829
        %873 = vst.msk [vmem:[#allocation2 + $0x30] sm:$0xff] %vm866, %v831
        %874 = vst.msk [vmem:[#allocation2 + $0x38] sm:$0xff] %vm866, %v833
        %875 = vst.msk [vmem:[#allocation2 + $0x40] sm:$0xff] %vm866, %v835
        %876 = vst.msk [vmem:[#allocation2 + $0x48] sm:$0xff] %vm866, %v837
        %877 = vst.msk [vmem:[#allocation2 + $0x50] sm:$0xff] %vm866, %v839
        %878 = vst.msk [vmem:[#allocation2 + $0x58] sm:$0xff] %vm866, %v841
        %879 = vst.msk [vmem:[#allocation2 + $0x60] sm:$0xff] %vm866, %v843
        %880 = vst.msk [vmem:[#allocation2 + $0x68] sm:$0xff] %vm866, %v845
        %881 = vst.msk [vmem:[#allocation2 + $0x70] sm:$0xff] %vm866, %v847
        %882 = vst.msk [vmem:[#allocation2 + $0x78] sm:$0xff] %vm866, %v849
        %v883 = vld [vmem:[#allocation2] sm:$0xff]
        %v884 = vld [vmem:[#allocation2 + $0x8] sm:$0xff]
        %v885 = vld [vmem:[#allocation2 + $0x10] sm:$0xff]
        %v886 = vld [vmem:[#allocation2 + $0x18] sm:$0xff]
        %v887 = vld [vmem:[#allocation2 + $0x20] sm:$0xff]
        %v888 = vld [vmem:[#allocation2 + $0x28] sm:$0xff]
        %v889 = vld [vmem:[#allocation2 + $0x30] sm:$0xff]
        %v890 = vld [vmem:[#allocation2 + $0x38] sm:$0xff]
        %v891 = vld [vmem:[#allocation2 + $0x40] sm:$0xff]
        %v892 = vld [vmem:[#allocation2 + $0x48] sm:$0xff]
        %v893 = vld [vmem:[#allocation2 + $0x50] sm:$0xff]
        %v894 = vld [vmem:[#allocation2 + $0x58] sm:$0xff]
        %v895 = vld [vmem:[#allocation2 + $0x60] sm:$0xff]
        %v896 = vld [vmem:[#allocation2 + $0x68] sm:$0xff]
        %v897 = vld [vmem:[#allocation2 + $0x70] sm:$0xff]
        %v898 = vld [vmem:[#allocation2 + $0x78] sm:$0xff]
        %v899 = vld [vmem:[%s2] sm:$0xff]
        %v900 = vld [vmem:[%s2 + $0x8] sm:$0xff]
        %v901 = vld [vmem:[%s2 + $0x10] sm:$0xff]
        %v902 = vld [vmem:[%s2 + $0x18] sm:$0xff]
        %v903 = vld [vmem:[%s3] sm:$0x1]
        %v905 = vlaneseq
        %v906 = vshrl.u32 %v905, 7
        %v907 = vsub.s32 0, %v906
        %v908 = vrot.slane %v903, %v907
        %vm910 = vcmask 261120
        %v912 = vsel %vm910, %v883, 0
        %v915 = vsel %vm910, %v884, 0
        %v918 = vsel %vm910, %v885, 0
        %v921 = vsel %vm910, %v886, 0
        %v924 = vsel %vm910, %v887, 0
        %v927 = vsel %vm910, %v888, 0
        %v930 = vsel %vm910, %v889, 0
        %v933 = vsel %vm910, %v890, 0
        %v936 = vsel %vm910, %v891, 0
        %v939 = vsel %vm910, %v892, 0
        %v942 = vsel %vm910, %v893, 0
        %v945 = vsel %vm910, %v894, 0
        %v948 = vsel %vm910, %v895, 0
        %v951 = vsel %vm910, %v896, 0
        %v954 = vsel %vm910, %v897, 0
        %v957 = vsel %vm910, %v898, 0
        %959 = vmatprep.subr.mxu0 0.0
        %960 = vmatpush1.msra.mxu0 0.0
        %961 = vmatprep.subr.mxu0 0.0
        %962 = vmatpush1.msra.mxu0 0.0
        %963 = vmatprep.subr.mxu0 0.0
        %964 = vmatpush1.msra.mxu0 0.0
        %965 = vmatprep.subr.mxu0 0.0
        %966 = vmatpush1.msra.mxu0 0.0
        %967 = vmatprep.subr.mxu0 0.0
        %968 = vmatpush1.msra.mxu0 0.0
        %969 = vmatprep.subr.mxu0 0.0
        %970 = vmatpush1.msra.mxu0 0.0
        %971 = vmatprep.subr.mxu0 0.0
        %972 = vmatpush1.msra.mxu0 0.0
        %973 = vmatprep.subr.mxu0 0.0
        %974 = vmatpush1.msra.mxu0 0.0
        %975 = vmatprep.subr.mxu0 0.0
        %976 = vmatpush1.msra.mxu0 0.0
        %977 = vmatprep.subr.mxu0 0.0
        %978 = vmatpush1.msra.mxu0 0.0
        %979 = vmatprep.subr.mxu0 0.0
        %980 = vmatpush1.msra.mxu0 0.0
        %981 = vmatprep.subr.mxu0 0.0
        %982 = vmatpush1.msra.mxu0 0.0
        %983 = vmatprep.subr.mxu0 0.0
        %984 = vmatpush1.msra.mxu0 %v902
        %985 = vmatprep.subr.mxu0 0.0
        %986 = vmatpush1.msra.mxu0 %v901
        %987 = vmatprep.subr.mxu0 0.0
        %988 = vmatpush1.msra.mxu0 %v900
        %989 = vmatprep.subr.mxu0 0.0
        %990 = vmatpush1.msra.mxu0 %v899
        %991 = vmatprep.subr.mxu0 0.0
        %992 = vmatpush2.msra.mxu0 0.0
        %993 = vmatprep.subr.mxu0 0.0
        %994 = vmatpush2.msra.mxu0 0.0
        %995 = vmatprep.subr.mxu0 0.0
        %996 = vmatpush2.msra.mxu0 0.0
        %997 = vmatprep.subr.mxu0 0.0
        %998 = vmatpush2.msra.mxu0 0.0
        %999 = vmatprep.subr.mxu0 0.0
        %1000 = vmatpush2.msra.mxu0 0.0
        %1001 = vmatprep.subr.mxu0 0.0
        %1002 = vmatpush2.msra.mxu0 0.0
        %1003 = vmatprep.subr.mxu0 0.0
        %1004 = vmatpush2.msra.mxu0 0.0
        %1005 = vmatprep.subr.mxu0 0.0
        %1006 = vmatpush2.msra.mxu0 0.0
        %1007 = vmatprep.subr.mxu0 0.0
        %1008 = vmatpush2.msra.mxu0 0.0
        %1009 = vmatprep.subr.mxu0 0.0
        %1010 = vmatpush2.msra.mxu0 0.0
        %1011 = vmatprep.subr.mxu0 0.0
        %1012 = vmatpush2.msra.mxu0 0.0
        %1013 = vmatprep.subr.mxu0 0.0
        %1014 = vmatpush2.msra.mxu0 0.0
        %1015 = vmatprep.subr.mxu0 0.0
        %1016 = vmatpush2.msra.mxu0 0.0
        %1017 = vmatprep.subr.mxu0 0.0
        %1018 = vmatpush2.msra.mxu0 0.0
        %1019 = vmatprep.subr.mxu0 0.0
        %1020 = vmatpush2.msra.mxu0 0.0
        %1021 = vmatprep.subr.mxu0 0.0
        %1022 = vmatpush2.msra.mxu0 0.0
        %1023 = vmatprep.mubr.f32.mxu0 0.0
        %1024 = vmatmul.mubr.f32.gmra.mxu0 %v912
        %v1025 = vpop.f32.mrf.mxu0
        %v1026 = vadd.f32 %v908, %v1025
        %v1027 = vpop.f32.mrf.mxu0
        %1028 = vmatprep.mubr.f32.mxu0 0.0
        %1029 = vmatmul.mubr.f32.gmra.mxu0 %v915
        %v1030 = vpop.f32.mrf.mxu0
        %v1031 = vadd.f32 %v908, %v1030
        %v1032 = vpop.f32.mrf.mxu0
        %1033 = vmatprep.mubr.f32.mxu0 0.0
        %1034 = vmatmul.mubr.f32.gmra.mxu0 %v918
        %v1035 = vpop.f32.mrf.mxu0
        %v1036 = vadd.f32 %v908, %v1035
        %v1037 = vpop.f32.mrf.mxu0
        %1038 = vmatprep.mubr.f32.mxu0 0.0
        %1039 = vmatmul.mubr.f32.gmra.mxu0 %v921
        %v1040 = vpop.f32.mrf.mxu0
        %v1041 = vadd.f32 %v908, %v1040
        %v1042 = vpop.f32.mrf.mxu0
        %1043 = vmatprep.mubr.f32.mxu0 0.0
        %1044 = vmatmul.mubr.f32.gmra.mxu0 %v924
        %v1045 = vpop.f32.mrf.mxu0
        %v1046 = vadd.f32 %v908, %v1045
        %v1047 = vpop.f32.mrf.mxu0
        %1048 = vmatprep.mubr.f32.mxu0 0.0
        %1049 = vmatmul.mubr.f32.gmra.mxu0 %v927
        %v1050 = vpop.f32.mrf.mxu0
        %v1051 = vadd.f32 %v908, %v1050
        %v1052 = vpop.f32.mrf.mxu0
        %1053 = vmatprep.mubr.f32.mxu0 0.0
        %1054 = vmatmul.mubr.f32.gmra.mxu0 %v930
        %v1055 = vpop.f32.mrf.mxu0
        %v1056 = vadd.f32 %v908, %v1055
        %v1057 = vpop.f32.mrf.mxu0
        %1058 = vmatprep.mubr.f32.mxu0 0.0
        %1059 = vmatmul.mubr.f32.gmra.mxu0 %v933
        %v1060 = vpop.f32.mrf.mxu0
        %v1061 = vadd.f32 %v908, %v1060
        %v1062 = vpop.f32.mrf.mxu0
        %1063 = vmatprep.mubr.f32.mxu0 0.0
        %1064 = vmatmul.mubr.f32.gmra.mxu0 %v936
        %v1065 = vpop.f32.mrf.mxu0
        %v1066 = vadd.f32 %v908, %v1065
        %v1067 = vpop.f32.mrf.mxu0
        %1068 = vmatprep.mubr.f32.mxu0 0.0
        %1069 = vmatmul.mubr.f32.gmra.mxu0 %v939
        %v1070 = vpop.f32.mrf.mxu0
        %v1071 = vadd.f32 %v908, %v1070
        %v1072 = vpop.f32.mrf.mxu0
        %1073 = vmatprep.mubr.f32.mxu0 0.0
        %1074 = vmatmul.mubr.f32.gmra.mxu0 %v942
        %v1075 = vpop.f32.mrf.mxu0
        %v1076 = vadd.f32 %v908, %v1075
        %v1077 = vpop.f32.mrf.mxu0
        %1078 = vmatprep.mubr.f32.mxu0 0.0
        %1079 = vmatmul.mubr.f32.gmra.mxu0 %v945
        %v1080 = vpop.f32.mrf.mxu0
        %v1081 = vadd.f32 %v908, %v1080
        %v1082 = vpop.f32.mrf.mxu0
        %1083 = vmatprep.mubr.f32.mxu0 0.0
        %1084 = vmatmul.mubr.f32.gmra.mxu0 %v948
        %v1085 = vpop.f32.mrf.mxu0
        %v1086 = vadd.f32 %v908, %v1085
        %v1087 = vpop.f32.mrf.mxu0
        %1088 = vmatprep.mubr.f32.mxu0 0.0
        %1089 = vmatmul.mubr.f32.gmra.mxu0 %v951
        %v1090 = vpop.f32.mrf.mxu0
        %v1091 = vadd.f32 %v908, %v1090
        %v1092 = vpop.f32.mrf.mxu0
        %1093 = vmatprep.mubr.f32.mxu0 0.0
        %1094 = vmatmul.mubr.f32.gmra.mxu0 %v954
        %v1095 = vpop.f32.mrf.mxu0
        %v1096 = vadd.f32 %v908, %v1095
        %v1097 = vpop.f32.mrf.mxu0
        %1098 = vmatprep.mubr.f32.mxu0 0.0
        %1099 = vmatmul.mubr.f32.gmra.mxu0 %v957
        %v1100 = vpop.f32.mrf.mxu0
        %v1101 = vadd.f32 %v908, %v1100
        %v1102 = vpop.f32.mrf.mxu0
        %1103 = vdwg.mxu0
        %v1104 = vmax.f32 %v1026, 0.0
        %v1105 = vmax.f32 %v1031, 0.0
        %v1106 = vmax.f32 %v1036, 0.0
        %v1107 = vmax.f32 %v1041, 0.0
        %v1108 = vmax.f32 %v1046, 0.0
        %v1109 = vmax.f32 %v1051, 0.0
        %v1110 = vmax.f32 %v1056, 0.0
        %v1111 = vmax.f32 %v1061, 0.0
        %v1112 = vmax.f32 %v1066, 0.0
        %v1113 = vmax.f32 %v1071, 0.0
        %v1114 = vmax.f32 %v1076, 0.0
        %v1115 = vmax.f32 %v1081, 0.0
        %v1116 = vmax.f32 %v1086, 0.0
        %v1117 = vmax.f32 %v1091, 0.0
        %v1118 = vmax.f32 %v1096, 0.0
        %v1119 = vmax.f32 %v1101, 0.0
        %v1120 = vld [vmem:[%s4] sm:$0xff]
        %v1121 = vld [vmem:[%s4 + $0x8] sm:$0xff]
        %v1122 = vld [vmem:[%s4 + $0x10] sm:$0xff]
        %v1123 = vld [vmem:[%s4 + $0x18] sm:$0xff]
        %v1124 = vld [vmem:[%s4 + $0x20] sm:$0xff]
        %v1125 = vld [vmem:[%s4 + $0x28] sm:$0xff]
        %v1126 = vld [vmem:[%s4 + $0x30] sm:$0xff]
        %v1127 = vld [vmem:[%s4 + $0x38] sm:$0xff]
        %v1128 = vld [vmem:[%s4 + $0x40] sm:$0xff]
        %v1129 = vld [vmem:[%s4 + $0x48] sm:$0xff]
        %v1130 = vld [vmem:[%s4 + $0x50] sm:$0xff]
        %v1131 = vld [vmem:[%s4 + $0x58] sm:$0xff]
        %v1132 = vld [vmem:[%s4 + $0x60] sm:$0xff]
        %v1133 = vld [vmem:[%s4 + $0x68] sm:$0xff]
        %v1134 = vld [vmem:[%s4 + $0x70] sm:$0xff]
        %v1135 = vld [vmem:[%s4 + $0x78] sm:$0xff]
        %v1136 = vld [vmem:[%s5] sm:$0x1]
        %v1138 = vlaneseq
        %v1139 = vshrl.u32 %v1138, 7
        %v1140 = vsub.s32 0, %v1139
        %v1141 = vrot.slane %v1136, %v1140
        %1143 = vmatprep.subr.mxu0 0.0
        %1144 = vmatpush1.msra.mxu0 %v1135
        %1145 = vmatprep.subr.mxu0 0.0
        %1146 = vmatpush1.msra.mxu0 %v1134
        %1147 = vmatprep.subr.mxu0 0.0
        %1148 = vmatpush1.msra.mxu0 %v1133
        %1149 = vmatprep.subr.mxu0 0.0
        %1150 = vmatpush1.msra.mxu0 %v1132
        %1151 = vmatprep.subr.mxu0 0.0
        %1152 = vmatpush1.msra.mxu0 %v1131
        %1153 = vmatprep.subr.mxu0 0.0
        %1154 = vmatpush1.msra.mxu0 %v1130
        %1155 = vmatprep.subr.mxu0 0.0
        %1156 = vmatpush1.msra.mxu0 %v1129
        %1157 = vmatprep.subr.mxu0 0.0
        %1158 = vmatpush1.msra.mxu0 %v1128
        %1159 = vmatprep.subr.mxu0 0.0
        %1160 = vmatpush1.msra.mxu0 %v1127
        %1161 = vmatprep.subr.mxu0 0.0
        %1162 = vmatpush1.msra.mxu0 %v1126
        %1163 = vmatprep.subr.mxu0 0.0
        %1164 = vmatpush1.msra.mxu0 %v1125
        %1165 = vmatprep.subr.mxu0 0.0
        %1166 = vmatpush1.msra.mxu0 %v1124
        %1167 = vmatprep.subr.mxu0 0.0
        %1168 = vmatpush1.msra.mxu0 %v1123
        %1169 = vmatprep.subr.mxu0 0.0
        %1170 = vmatpush1.msra.mxu0 %v1122
        %1171 = vmatprep.subr.mxu0 0.0
        %1172 = vmatpush1.msra.mxu0 %v1121
        %1173 = vmatprep.subr.mxu0 0.0
        %1174 = vmatpush1.msra.mxu0 %v1120
        %1175 = vmatprep.subr.mxu0 0.0
        %1176 = vmatpush2.msra.mxu0 0.0
        %1177 = vmatprep.subr.mxu0 0.0
        %1178 = vmatpush2.msra.mxu0 0.0
        %1179 = vmatprep.subr.mxu0 0.0
        %1180 = vmatpush2.msra.mxu0 0.0
        %1181 = vmatprep.subr.mxu0 0.0
        %1182 = vmatpush2.msra.mxu0 0.0
        %1183 = vmatprep.subr.mxu0 0.0
        %1184 = vmatpush2.msra.mxu0 0.0
        %1185 = vmatprep.subr.mxu0 0.0
        %1186 = vmatpush2.msra.mxu0 0.0
        %1187 = vmatprep.subr.mxu0 0.0
        %1188 = vmatpush2.msra.mxu0 0.0
        %1189 = vmatprep.subr.mxu0 0.0
        %1190 = vmatpush2.msra.mxu0 0.0
        %1191 = vmatprep.subr.mxu0 0.0
        %1192 = vmatpush2.msra.mxu0 0.0
        %1193 = vmatprep.subr.mxu0 0.0
        %1194 = vmatpush2.msra.mxu0 0.0
        %1195 = vmatprep.subr.mxu0 0.0
        %1196 = vmatpush2.msra.mxu0 0.0
        %1197 = vmatprep.subr.mxu0 0.0
        %1198 = vmatpush2.msra.mxu0 0.0
        %1199 = vmatprep.subr.mxu0 0.0
        %1200 = vmatpush2.msra.mxu0 0.0
        %1201 = vmatprep.subr.mxu0 0.0
        %1202 = vmatpush2.msra.mxu0 0.0
        %1203 = vmatprep.subr.mxu0 0.0
        %1204 = vmatpush2.msra.mxu0 0.0
        %1205 = vmatprep.subr.mxu0 0.0
        %1206 = vmatpush2.msra.mxu0 0.0
        %1207 = vmatprep.mubr.f32.mxu0 0.0
        %1208 = vmatmul.mubr.f32.gmra.mxu0 %v1104
        %v1209 = vpop.f32.mrf.mxu0
        %v1210 = vadd.f32 %v1141, %v1209
        %v1211 = vpop.f32.mrf.mxu0
        %1212 = vmatprep.mubr.f32.mxu0 0.0
        %1213 = vmatmul.mubr.f32.gmra.mxu0 %v1105
        %v1214 = vpop.f32.mrf.mxu0
        %v1215 = vadd.f32 %v1141, %v1214
        %v1216 = vpop.f32.mrf.mxu0
        %1217 = vmatprep.mubr.f32.mxu0 0.0
        %1218 = vmatmul.mubr.f32.gmra.mxu0 %v1106
        %v1219 = vpop.f32.mrf.mxu0
        %v1220 = vadd.f32 %v1141, %v1219
        %v1221 = vpop.f32.mrf.mxu0
        %1222 = vmatprep.mubr.f32.mxu0 0.0
        %1223 = vmatmul.mubr.f32.gmra.mxu0 %v1107
        %v1224 = vpop.f32.mrf.mxu0
        %v1225 = vadd.f32 %v1141, %v1224
        %v1226 = vpop.f32.mrf.mxu0
        %1227 = vmatprep.mubr.f32.mxu0 0.0
        %1228 = vmatmul.mubr.f32.gmra.mxu0 %v1108
        %v1229 = vpop.f32.mrf.mxu0
        %v1230 = vadd.f32 %v1141, %v1229
        %v1231 = vpop.f32.mrf.mxu0
        %1232 = vmatprep.mubr.f32.mxu0 0.0
        %1233 = vmatmul.mubr.f32.gmra.mxu0 %v1109
        %v1234 = vpop.f32.mrf.mxu0
        %v1235 = vadd.f32 %v1141, %v1234
        %v1236 = vpop.f32.mrf.mxu0
        %1237 = vmatprep.mubr.f32.mxu0 0.0
        %1238 = vmatmul.mubr.f32.gmra.mxu0 %v1110
        %v1239 = vpop.f32.mrf.mxu0
        %v1240 = vadd.f32 %v1141, %v1239
        %v1241 = vpop.f32.mrf.mxu0
        %1242 = vmatprep.mubr.f32.mxu0 0.0
        %1243 = vmatmul.mubr.f32.gmra.mxu0 %v1111
        %v1244 = vpop.f32.mrf.mxu0
        %v1245 = vadd.f32 %v1141, %v1244
        %v1246 = vpop.f32.mrf.mxu0
        %1247 = vmatprep.mubr.f32.mxu0 0.0
        %1248 = vmatmul.mubr.f32.gmra.mxu0 %v1112
        %v1249 = vpop.f32.mrf.mxu0
        %v1250 = vadd.f32 %v1141, %v1249
        %v1251 = vpop.f32.mrf.mxu0
        %1252 = vmatprep.mubr.f32.mxu0 0.0
        %1253 = vmatmul.mubr.f32.gmra.mxu0 %v1113
        %v1254 = vpop.f32.mrf.mxu0
        %v1255 = vadd.f32 %v1141, %v1254
        %v1256 = vpop.f32.mrf.mxu0
        %1257 = vmatprep.mubr.f32.mxu0 0.0
        %1258 = vmatmul.mubr.f32.gmra.mxu0 %v1114
        %v1259 = vpop.f32.mrf.mxu0
        %v1260 = vadd.f32 %v1141, %v1259
        %v1261 = vpop.f32.mrf.mxu0
        %1262 = vmatprep.mubr.f32.mxu0 0.0
        %1263 = vmatmul.mubr.f32.gmra.mxu0 %v1115
        %v1264 = vpop.f32.mrf.mxu0
        %v1265 = vadd.f32 %v1141, %v1264
        %v1266 = vpop.f32.mrf.mxu0
        %1267 = vmatprep.mubr.f32.mxu0 0.0
        %1268 = vmatmul.mubr.f32.gmra.mxu0 %v1116
        %v1269 = vpop.f32.mrf.mxu0
        %v1270 = vadd.f32 %v1141, %v1269
        %v1271 = vpop.f32.mrf.mxu0
        %1272 = vmatprep.mubr.f32.mxu0 0.0
        %1273 = vmatmul.mubr.f32.gmra.mxu0 %v1117
        %v1274 = vpop.f32.mrf.mxu0
        %v1275 = vadd.f32 %v1141, %v1274
        %v1276 = vpop.f32.mrf.mxu0
        %1277 = vmatprep.mubr.f32.mxu0 0.0
        %1278 = vmatmul.mubr.f32.gmra.mxu0 %v1118
        %v1279 = vpop.f32.mrf.mxu0
        %v1280 = vadd.f32 %v1141, %v1279
        %v1281 = vpop.f32.mrf.mxu0
        %1282 = vmatprep.mubr.f32.mxu0 0.0
        %1283 = vmatmul.mubr.f32.gmra.mxu0 %v1119
        %v1284 = vpop.f32.mrf.mxu0
        %v1285 = vadd.f32 %v1141, %v1284
        %v1286 = vpop.f32.mrf.mxu0
        %1287 = vdwg.mxu0
        %1288 = vmax.xlane.f32.xlu0 %v1210
        %v1289 = vpop.xlane.xlu0 %1288
        %1290 = vmax.xlane.f32.xlu0 %v1215
        %v1291 = vpop.xlane.xlu0 %1290
        %1292 = vmax.xlane.f32.xlu0 %v1220
        %v1293 = vpop.xlane.xlu0 %1292
        %1294 = vmax.xlane.f32.xlu0 %v1225
        %v1295 = vpop.xlane.xlu0 %1294
        %1296 = vmax.xlane.f32.xlu0 %v1230
        %v1297 = vpop.xlane.xlu0 %1296
        %1298 = vmax.xlane.f32.xlu0 %v1235
        %v1299 = vpop.xlane.xlu0 %1298
        %1300 = vmax.xlane.f32.xlu0 %v1240
        %v1301 = vpop.xlane.xlu0 %1300
        %1302 = vmax.xlane.f32.xlu0 %v1245
        %v1303 = vpop.xlane.xlu0 %1302
        %1304 = vmax.xlane.f32.xlu0 %v1250
        %v1305 = vpop.xlane.xlu0 %1304
        %1306 = vmax.xlane.f32.xlu0 %v1255
        %v1307 = vpop.xlane.xlu0 %1306
        %1308 = vmax.xlane.f32.xlu0 %v1260
        %v1309 = vpop.xlane.xlu0 %1308
        %1310 = vmax.xlane.f32.xlu0 %v1265
        %v1311 = vpop.xlane.xlu0 %1310
        %1312 = vmax.xlane.f32.xlu0 %v1270
        %v1313 = vpop.xlane.xlu0 %1312
        %1314 = vmax.xlane.f32.xlu0 %v1275
        %v1315 = vpop.xlane.xlu0 %1314
        %1316 = vmax.xlane.f32.xlu0 %v1280
        %v1317 = vpop.xlane.xlu0 %1316
        %1318 = vmax.xlane.f32.xlu0 %v1285
        %v1319 = vpop.xlane.xlu0 %1318
        %v1320 = vsub.f32 %v1210, %v1289
        %v1321 = vsub.f32 %v1215, %v1291
        %v1322 = vsub.f32 %v1220, %v1293
        %v1323 = vsub.f32 %v1225, %v1295
        %v1324 = vsub.f32 %v1230, %v1297
        %v1325 = vsub.f32 %v1235, %v1299
        %v1326 = vsub.f32 %v1240, %v1301
        %v1327 = vsub.f32 %v1245, %v1303
        %v1328 = vsub.f32 %v1250, %v1305
        %v1329 = vsub.f32 %v1255, %v1307
        %v1330 = vsub.f32 %v1260, %v1309
        %v1331 = vsub.f32 %v1265, %v1311
        %v1332 = vsub.f32 %v1270, %v1313
        %v1333 = vsub.f32 %v1275, %v1315
        %v1334 = vsub.f32 %v1280, %v1317
        %v1335 = vsub.f32 %v1285, %v1319
        %v1336 = vmul.f32 %v1320, 1.442695
        %v1337 = vpow.pop %v1336
        %v1338 = vmul.f32 %v1321, 1.442695
        %v1339 = vpow.pop %v1338
        %v1340 = vmul.f32 %v1322, 1.442695
        %v1341 = vpow.pop %v1340
        %v1342 = vmul.f32 %v1323, 1.442695
        %v1343 = vpow.pop %v1342
        %v1344 = vmul.f32 %v1324, 1.442695
        %v1345 = vpow.pop %v1344
        %v1346 = vmul.f32 %v1325, 1.442695
        %v1347 = vpow.pop %v1346
        %v1348 = vmul.f32 %v1326, 1.442695
        %v1349 = vpow.pop %v1348
        %v1350 = vmul.f32 %v1327, 1.442695
        %v1351 = vpow.pop %v1350
        %v1352 = vmul.f32 %v1328, 1.442695
        %v1353 = vpow.pop %v1352
        %v1354 = vmul.f32 %v1329, 1.442695
        %v1355 = vpow.pop %v1354
        %v1356 = vmul.f32 %v1330, 1.442695
        %v1357 = vpow.pop %v1356
        %v1358 = vmul.f32 %v1331, 1.442695
        %v1359 = vpow.pop %v1358
        %v1360 = vmul.f32 %v1332, 1.442695
        %v1361 = vpow.pop %v1360
        %v1362 = vmul.f32 %v1333, 1.442695
        %v1363 = vpow.pop %v1362
        %v1364 = vmul.f32 %v1334, 1.442695
        %v1365 = vpow.pop %v1364
        %v1366 = vmul.f32 %v1335, 1.442695
        %v1367 = vpow.pop %v1366
        %1368 = vadd.xlane.f32.xlu0 %v1337
        %v1369 = vpop.xlane.xlu0 %1368
        %1370 = vadd.xlane.f32.xlu0 %v1339
        %v1371 = vpop.xlane.xlu0 %1370
        %1372 = vadd.xlane.f32.xlu0 %v1341
        %v1373 = vpop.xlane.xlu0 %1372
        %1374 = vadd.xlane.f32.xlu0 %v1343
        %v1375 = vpop.xlane.xlu0 %1374
        %1376 = vadd.xlane.f32.xlu0 %v1345
        %v1377 = vpop.xlane.xlu0 %1376
        %1378 = vadd.xlane.f32.xlu0 %v1347
        %v1379 = vpop.xlane.xlu0 %1378
        %1380 = vadd.xlane.f32.xlu0 %v1349
        %v1381 = vpop.xlane.xlu0 %1380
        %1382 = vadd.xlane.f32.xlu0 %v1351
        %v1383 = vpop.xlane.xlu0 %1382
        %1384 = vadd.xlane.f32.xlu0 %v1353
        %v1385 = vpop.xlane.xlu0 %1384
        %1386 = vadd.xlane.f32.xlu0 %v1355
        %v1387 = vpop.xlane.xlu0 %1386
        %1388 = vadd.xlane.f32.xlu0 %v1357
        %v1389 = vpop.xlane.xlu0 %1388
        %1390 = vadd.xlane.f32.xlu0 %v1359
        %v1391 = vpop.xlane.xlu0 %1390
        %1392 = vadd.xlane.f32.xlu0 %v1361
        %v1393 = vpop.xlane.xlu0 %1392
        %1394 = vadd.xlane.f32.xlu0 %v1363
        %v1395 = vpop.xlane.xlu0 %1394
        %1396 = vadd.xlane.f32.xlu0 %v1365
        %v1397 = vpop.xlane.xlu0 %1396
        %1398 = vadd.xlane.f32.xlu0 %v1367
        %v1399 = vpop.xlane.xlu0 %1398
        %v1400 = vlog2.pop %v1369
        %v1401 = vmul.f32 %v1400, 0.6931472
        %v1402 = vlog2.pop %v1371
        %v1403 = vmul.f32 %v1402, 0.6931472
        %v1404 = vlog2.pop %v1373
        %v1405 = vmul.f32 %v1404, 0.6931472
        %v1406 = vlog2.pop %v1375
        %v1407 = vmul.f32 %v1406, 0.6931472
        %v1408 = vlog2.pop %v1377
        %v1409 = vmul.f32 %v1408, 0.6931472
        %v1410 = vlog2.pop %v1379
        %v1411 = vmul.f32 %v1410, 0.6931472
        %v1412 = vlog2.pop %v1381
        %v1413 = vmul.f32 %v1412, 0.6931472
        %v1414 = vlog2.pop %v1383
        %v1415 = vmul.f32 %v1414, 0.6931472
        %v1416 = vlog2.pop %v1385
        %v1417 = vmul.f32 %v1416, 0.6931472
        %v1418 = vlog2.pop %v1387
        %v1419 = vmul.f32 %v1418, 0.6931472
        %v1420 = vlog2.pop %v1389
        %v1421 = vmul.f32 %v1420, 0.6931472
        %v1422 = vlog2.pop %v1391
        %v1423 = vmul.f32 %v1422, 0.6931472
        %v1424 = vlog2.pop %v1393
        %v1425 = vmul.f32 %v1424, 0.6931472
        %v1426 = vlog2.pop %v1395
        %v1427 = vmul.f32 %v1426, 0.6931472
        %v1428 = vlog2.pop %v1397
        %v1429 = vmul.f32 %v1428, 0.6931472
        %v1430 = vlog2.pop %v1399
        %v1431 = vmul.f32 %v1430, 0.6931472
        %v1432 = vsub.f32 %v1320, %v1401
        %v1433 = vsub.f32 %v1321, %v1403
        %v1434 = vsub.f32 %v1322, %v1405
        %v1435 = vsub.f32 %v1323, %v1407
        %v1436 = vsub.f32 %v1324, %v1409
        %v1437 = vsub.f32 %v1325, %v1411
        %v1438 = vsub.f32 %v1326, %v1413
        %v1439 = vsub.f32 %v1327, %v1415
        %v1440 = vsub.f32 %v1328, %v1417
        %v1441 = vsub.f32 %v1329, %v1419
        %v1442 = vsub.f32 %v1330, %v1421
        %v1443 = vsub.f32 %v1331, %v1423
        %v1444 = vsub.f32 %v1332, %v1425
        %v1445 = vsub.f32 %v1333, %v1427
        %v1446 = vsub.f32 %v1334, %v1429
        %v1447 = vsub.f32 %v1335, %v1431
        %1448 = vst [vmem:[%s245] sm:$0xff] %v1432
        %1449 = vst [vmem:[%s245 + $0x8] sm:$0xff] %v1433
        %1450 = vst [vmem:[%s245 + $0x10] sm:$0xff] %v1434
        %1451 = vst [vmem:[%s245 + $0x18] sm:$0xff] %v1435
        %1452 = vst [vmem:[%s245 + $0x20] sm:$0xff] %v1436
        %1453 = vst [vmem:[%s245 + $0x28] sm:$0xff] %v1437
        %1454 = vst [vmem:[%s245 + $0x30] sm:$0xff] %v1438
        %1455 = vst [vmem:[%s245 + $0x38] sm:$0xff] %v1439
        %1456 = vst [vmem:[%s245 + $0x40] sm:$0xff] %v1440
        %1457 = vst [vmem:[%s245 + $0x48] sm:$0xff] %v1441
        %1458 = vst [vmem:[%s245 + $0x50] sm:$0xff] %v1442
        %1459 = vst [vmem:[%s245 + $0x58] sm:$0xff] %v1443
        %1460 = vst [vmem:[%s245 + $0x60] sm:$0xff] %v1444
        %1461 = vst [vmem:[%s245 + $0x68] sm:$0xff] %v1445
        %1462 = vst [vmem:[%s245 + $0x70] sm:$0xff] %v1446
        %1463 = vst [vmem:[%s245 + $0x78] sm:$0xff] %v1447
        %s1464 = sand.u32 %s159, 1
        %s1465 = scalar_lea.sflag [#allocation4], %s1464
        %s1466 = sand.u32 %s159, 1
        %s1467 = smul.addr %s1466, 128
        %s1468 = scalar_lea.vmem [#allocation3], %s1467
        // Predicated region
        $region45: #{tpu_custom_call.1} parent=43 // pred_check
          %p1469 = pneg %p169
        $region46: #{tpu_custom_call.1} parent=43 // pred_check_branch
          %1471 = sbr.rel (%p1469) target = $region48
        $region47: #{tpu_custom_call.1} parent=43 // pred_region
          %s1472 = smul.u32 16, %s20
          %s1474 = ssub.s32 2048, 2048
          %1475 = vsyncadd %s1465, %s1474
          %s1476 = smul.addr %s1472, 128
          %s1477 = scalar_lea.hbm %s6, %s1476
          %s1478 = sshll.u32 %s1468, 4
          %s1479 = int_to_ptr.vmem [resolvable:$true] %s1478
          %1484 = dma.vmem_to_hbm [thread:$0]  %s1479, 2048, %s1477, %s1465, 128, 128, 8
        $region48: #{tpu_custom_call.1} parent=43 // pred_fallthru
          _
      $region44: #{tpu_custom_call.1} parent=5 // pred_fallthru
        _
      %p1485 = scmp.le.s32.totalorder 2, %s15
      // Predicated region
      $region49: #{tpu_custom_call.1} parent=5 // pred_check
        %p1486 = pneg %p1485
      $region50: #{tpu_custom_call.1} parent=5 // pred_check_branch
        %1488 = sbr.rel (%p1486) target = $region52
      $region51: #{tpu_custom_call.1} parent=5 // pred_region
        %s1489 = ssub.s32 %s15, 2
        // Predicated region
        $region53: #{tpu_custom_call.1} parent=51 // pred_check
          %p1490 = pneg %p175
        $region54: #{tpu_custom_call.1} parent=51 // pred_check_branch
          %1492 = sbr.rel (%p1490) target = $region56
        $region55: #{tpu_custom_call.1} parent=51 // pred_region
          %s1493 = sand.u32 %s160, 1
          %s1494 = scalar_lea.sflag [#allocation4], %s1493
          %s1495 = sand.u32 %s160, 1
          %s1496 = smul.addr %s1495, 128
          %s1497 = scalar_lea.vmem [#allocation3], %s1496
          %1498 = dma.done %s1494, 2048
        $region56: #{tpu_custom_call.1} parent=51 // pred_fallthru
          _
      $region52: #{tpu_custom_call.1} parent=5 // pred_fallthru
        _
    $region6: #{tpu_custom_call.1} parent=1 // loop_footer
      %s19 = sadd.s32 1, %s15
    $region7: #{tpu_custom_call.1} parent=1 // loop_footer_branch
      %14 = sbr.rel target = $region3
    $region8: #{tpu_custom_call.1} parent=1 // loop_exit
      _
    %1499 = vsyncpa [#allocation4], 1
    %s1500 = scalar_lea.sflag [#allocation4], 1
    %1501 = vsyncpa %s1500, 1

</llo_original>
